<compile_context>
chip_gen: v7x
topology: tpu7x:2x2x1
jax: 0.10.0
libtpu: 0.0.40
codegen_flags: <defaults>
</compile_context>

<pallas_src>
import functools

import jax
import jax.numpy as jnp
from jax import lax
from jax.experimental import pallas as pl
from jax.experimental.pallas import tpu as pltpu

LN_EPS = 1e-5                      # nn.LayerNorm default eps


def _round_up(a, b):
    return (a + b - 1) // b * b


# ---------------------------------------------------------------------------
# Hardware introspection (best effort, always falls back to safe defaults)
# ---------------------------------------------------------------------------
_PHYS_VMEM = None
_BUFFERED_OK = None


def _phys_vmem_bytes():
    global _PHYS_VMEM
    if _PHYS_VMEM is None:
        phys = None
        try:
            info = pltpu.get_tpu_info()
            for attr in ("vmem_capacity_bytes", "vmem_size_bytes", "vmem_bytes"):
                v = getattr(info, attr, None)
                if v:
                    phys = int(v)
                    break
        except Exception:
            phys = None
        _PHYS_VMEM = phys if phys else 64 * 1024 * 1024   # conservative (v7x-sized)
    return _PHYS_VMEM


def _vmem_limit():
    phys = _phys_vmem_bytes()
    # v7x (64 MiB physical) -> ~48 MiB scoped; v5e/v6e (128 MiB) -> ~100 MiB.
    return int(max(min(phys - (16 << 20), 100 << 20), 32 << 20))


def _is_v5e_chip():
    try:
        kind = jax.devices()[0].device_kind.lower()
        return ("v5 lite" in kind) or ("v5e" in kind) or ("v5litepod" in kind)
    except Exception:
        return False


def _probe_kernel(x_ref, o_ref):
    o_ref[...] = x_ref[...] * 2.0


def _buffered_weights_supported():
    """One-time probe: can grid-invariant specs use pipeline_mode=pl.Buffered(1)?"""
    global _BUFFERED_OK
    if _BUFFERED_OK is None:
        try:
            fn = pl.pallas_call(
                _probe_kernel,
                out_shape=jax.ShapeDtypeStruct((8, 128), jnp.float32),
                grid_spec=pltpu.PrefetchScalarGridSpec(
                    num_scalar_prefetch=0,
                    grid=(2,),
                    in_specs=[pl.BlockSpec((8, 128), lambda i: (0, 0),
                                           pipeline_mode=pl.Buffered(1))],
                    out_specs=pl.BlockSpec((8, 128), lambda i: (0, 0)),
                ),
            )
            jax.jit(fn).lower(jax.ShapeDtypeStruct((8, 128), jnp.float32)).compile()
            _BUFFERED_OK = True
        except Exception:
            _BUFFERED_OK = False
    return _BUFFERED_OK


def _wspec(shape):
    """BlockSpec for a grid-invariant (weight/bias/LN) operand: single-buffered."""
    idx = lambda *_: (0,) * len(shape)
    if _buffered_weights_supported():
        return pl.BlockSpec(shape, idx, pipeline_mode=pl.Buffered(1))
    return pl.BlockSpec(shape, idx)


def _pick_block_b(B):
    small_vmem = _phys_vmem_bytes() <= 72 * 1024 * 1024   # v7x-class
    cap = 4 if small_vmem else 8
    for bb in (8, 4, 2, 1):
        if bb > cap or B % bb:
            continue
        # On dual-TensorCore chips keep >= 2 grid steps so the "parallel" axis
        # actually shards across both cores.
        if small_vmem and B >= 2 and B // bb < 2:
            continue
        return bb
    return 1


# ---------------------------------------------------------------------------
# Math helpers (in-kernel)
# ---------------------------------------------------------------------------
def _layer_norm(x, gamma, beta):
    x = x.astype(jnp.float32)
    mu = jnp.mean(x, axis=-1, keepdims=True)
    xc = x - mu
    var = jnp.mean(xc * xc, axis=-1, keepdims=True)
    return xc * lax.rsqrt(var + LN_EPS) * gamma + beta


def _gelu(x):
    # tanh-approximate GELU (maps to the EUP tanh slot).
    # TODO(synk): nn.GELU default is the exact erf form; tanh approx differs by ~1e-3.
    c = 0.7978845608028654  # sqrt(2/pi)
    return 0.5 * x * (1.0 + jnp.tanh(c * (x + 0.044715 * x * x * x)))


# ---------------------------------------------------------------------------
# Kernels
# ---------------------------------------------------------------------------
def _patch_embed_kernel(x_ref, w_ref, b_ref, o_ref):
    """Row tile of unfolded patches (tm, K) @ (K, E) bf16 + (1, E) -> (tm, E)."""
    y = jnp.dot(x_ref[...].astype(jnp.bfloat16), w_ref[...],
                preferred_element_type=jnp.float32) + b_ref[...]
    o_ref[...] = y.astype(o_ref.dtype)


def _block_kernel(x_ref, ln1g_ref, ln1b_ref, wqkv_ref, bqkv_ref, wproj_ref,
                  bproj_ref, ln2g_ref, ln2b_ref, wfc1_ref, bfc1_ref,
                  wfc2_ref, bfc2_ref, o_ref, *, num_heads, head_dim, n_valid):
    """One transformer Block: LN1 -> MHSA -> +res -> LN2 -> MLP -> +res."""
    bb, n_pad, c = x_ref.shape
    H, dh = num_heads, head_dim

    x = x_ref[...].astype(jnp.float32).reshape(bb * n_pad, c)   # residual stream, f32

    # ---- LN1 + fused qkv projection (softmax scale pre-folded into q weights) ----
    h = _layer_norm(x, ln1g_ref[...], ln1b_ref[...])
    qkv = (jnp.dot(h.astype(jnp.bfloat16), wqkv_ref[...],
                   preferred_element_type=jnp.float32)
           + bqkv_ref[...]).astype(jnp.bfloat16)                # cast to bf16 immediately
    qkv = qkv.reshape(bb, n_pad, 3 * c)

    # One head-major relayout: (bb, n, 3c) -> three (bb*H, n, dh) operands.
    q_heads, k_heads, v_heads = [], [], []
    for hh in range(H):
        q_heads.append(qkv[:, :, hh * dh:(hh + 1) * dh])
        k_heads.append(qkv[:, :, c + hh * dh:c + (hh + 1) * dh])
        v_heads.append(qkv[:, :, 2 * c + hh * dh:2 * c + (hh + 1) * dh])
    qh = jnp.stack(q_heads, axis=1).reshape(bb * H, n_pad, dh)
    kh = jnp.stack(k_heads, axis=1).reshape(bb * H, n_pad, dh)
    vh = jnp.stack(v_heads, axis=1).reshape(bb * H, n_pad, dh)

    # ---- batched attention over all bb*H heads at once (f32 softmax) ----
    s = jnp.einsum('zqd,zkd->zqk', qh, kh, preferred_element_type=jnp.float32)
    if n_valid < n_pad:                       # mask padded key columns
        key_mask = lax.broadcasted_iota(jnp.int32, (1, 1, n_pad), 2) < n_valid
        s = jnp.where(key_mask, s, -1e30)
    m = jnp.max(s, axis=-1, keepdims=True)
    e = jnp.exp(s - m)
    p = e * pl.reciprocal(jnp.sum(e, axis=-1, keepdims=True), approx=True)
    ctx = jnp.einsum('zqk,zkd->zqd', p.astype(jnp.bfloat16), vh,
                     preferred_element_type=jnp.float32)        # (bb*H, n, dh)

    # Relayout ctx back to (bb*n, c) once, then one full-depth projection matmul.
    ctx = ctx.astype(jnp.bfloat16).reshape(bb, H, n_pad, dh)
    ctx = jnp.concatenate([ctx[:, hh] for hh in range(H)], axis=-1)   # (bb, n, c)
    ctx = ctx.reshape(bb * n_pad, c)
    attn_out = jnp.dot(ctx, wproj_ref[...],
                       preferred_element_type=jnp.float32) + bproj_ref[...]

    x = x + attn_out                                                  # residual 1

    # ---- LN2 + MLP (bf16 MXU inputs, f32 accumulation) ----
    h = _layer_norm(x, ln2g_ref[...], ln2b_ref[...])
    h = jnp.dot(h.astype(jnp.bfloat16), wfc1_ref[...],
                preferred_element_type=jnp.float32) + bfc1_ref[...]
    h = _gelu(h)
    h = jnp.dot(h.astype(jnp.bfloat16), wfc2_ref[...],
                preferred_element_type=jnp.float32) + bfc2_ref[...]
    x = x + h                                                         # residual 2

    # NOTE: padded token rows (n_valid..n_pad) carry finite junk through the
    # residual stream by design; they are never read by the classifier head.
    o_ref[...] = x.reshape(bb, n_pad, c).astype(o_ref.dtype)


def _head_kernel(x_ref, g_ref, b_ref, w_ref, bh_ref, o_ref):
    """Final LayerNorm + classification head on the cls tokens."""
    xn = _layer_norm(x_ref[...], g_ref[...], b_ref[...])
    y = jnp.dot(xn.astype(jnp.bfloat16), w_ref[...],
                preferred_element_type=jnp.float32) + bh_ref[...]
    o_ref[...] = y.astype(o_ref.dtype)


# ---------------------------------------------------------------------------
# pallas_call wrappers
# ---------------------------------------------------------------------------
def _patch_embed(patches, w_pe, b_pe):
    """(R0, K) unfolded patch rows -> (R0, E), row-tiled."""
    R0, K = patches.shape
    E = w_pe.shape[1]
    tile_m = 256 if R0 >= 256 else _round_up(R0, 8)
    R = _round_up(R0, tile_m)
    if R != R0:
        patches = jnp.pad(patches, ((0, R - R0), (0, 0)))
    out = pl.pallas_call(
        _patch_embed_kernel,
        out_shape=jax.ShapeDtypeStruct((R, E), jnp.float32),
        grid_spec=pltpu.PrefetchScalarGridSpec(
            num_scalar_prefetch=0,
            grid=(R // tile_m,),
            in_specs=[
                pl.BlockSpec((tile_m, K), lambda i: (i, 0)),
                _wspec((K, E)),
                _wspec((1, E)),
            ],
            out_specs=pl.BlockSpec((tile_m, E), lambda i: (i, 0)),
        ),
        compiler_params=pltpu.CompilerParams(
            dimension_semantics=("parallel",), vmem_limit_bytes=_vmem_limit()),
    )(patches, w_pe, b_pe)
    return out[:R0]


def _transformer_block(x, blk, *, num_heads, n_valid, block_b):
    B, n_pad, C = x.shape
    dh = C // num_heads
    Hd = blk['w_fc1'].shape[1]
    scale = dh ** -0.5

    # Fold the softmax scale into the q columns of the fused qkv projection
    # (wrapper-side, negligible cost; removes a per-token VPU multiply in-kernel).
    w_qkv = jnp.concatenate(
        [(blk['w_qkv'][:, :C].astype(jnp.float32) * scale).astype(jnp.bfloat16),
         blk['w_qkv'][:, C:]], axis=1)
    b_qkv = jnp.concatenate([blk['b_qkv'][:, :C] * scale, blk['b_qkv'][:, C:]], axis=1)

    kernel = functools.partial(_block_kernel, num_heads=num_heads,
                               head_dim=dh, n_valid=n_valid)

    return pl.pallas_call(
        kernel,
        out_shape=jax.ShapeDtypeStruct((B, n_pad, C), x.dtype),
        grid_spec=pltpu.PrefetchScalarGridSpec(
            num_scalar_prefetch=0,
            grid=(B // block_b,),
            in_specs=[
                pl.BlockSpec((block_b, n_pad, C), lambda i: (i, 0, 0)),     # x
                _wspec((1, C)), _wspec((1, C)),                             # ln1 gamma / beta
                _wspec((C, 3 * C)), _wspec((1, 3 * C)),                     # qkv w (bf16) / b
                _wspec((C, C)), _wspec((1, C)),                             # proj w (bf16) / b
                _wspec((1, C)), _wspec((1, C)),                             # ln2 gamma / beta
                _wspec((C, Hd)), _wspec((1, Hd)),                           # fc1 w (bf16) / b
                _wspec((Hd, C)), _wspec((1, C)),                            # fc2 w (bf16) / b
            ],
            out_specs=pl.BlockSpec((block_b, n_pad, C), lambda i: (i, 0, 0)),
        ),
        compiler_params=pltpu.CompilerParams(
            dimension_semantics=("parallel",), vmem_limit_bytes=_vmem_limit()),
    )(x, blk['ln1_g'], blk['ln1_b'], w_qkv, b_qkv, blk['w_proj'], blk['b_proj'],
      blk['ln2_g'], blk['ln2_b'], blk['w_fc1'], blk['b_fc1'], blk['w_fc2'],
      blk['b_fc2'])


def _norm_head(cls_x, g, b, w_head, b_head):
    B, C = cls_x.shape
    n_cls = w_head.shape[1]
    n_cls_pad = _round_up(n_cls, 128)          # lane-dense classifier output
    if n_cls_pad != n_cls:
        w_head = jnp.pad(w_head, ((0, 0), (0, n_cls_pad - n_cls)))
        b_head = jnp.pad(b_head, ((0, 0), (0, n_cls_pad - n_cls)))
    out = pl.pallas_call(
        _head_kernel,
        out_shape=jax.ShapeDtypeStruct((B, n_cls_pad), jnp.float32),
        grid_spec=pltpu.PrefetchScalarGridSpec(
            num_scalar_prefetch=0,
            grid=(1,),
            in_specs=[
                pl.BlockSpec((B, C), lambda i: (0, 0)),
                _wspec((1, C)), _wspec((1, C)),
                _wspec((C, n_cls_pad)), _wspec((1, n_cls_pad)),
            ],
            out_specs=pl.BlockSpec((B, n_cls_pad), lambda i: (0, 0)),
        ),
        compiler_params=pltpu.CompilerParams(
            dimension_semantics=("arbitrary",), vmem_limit_bytes=_vmem_limit()),
    )(cls_x, g, b, w_head, b_head)
    return out[:, :n_cls]


def deit_forward(x_img, params, *, patch_size, num_heads, block_b=None,
                 residual_dtype=None):
    """Full DeiT forward: image (B, Cin, H, W) -> logits (B, num_classes)."""
    B, c_in, hs, ws = x_img.shape
    p = patch_size
    gh, gw = hs // p, ws // p
    n_patches = gh * gw
    E = params['b_pe'].shape[-1]

    # Patch-embed conv (kernel == stride) == patch unfold (pure layout) + linear kernel.
    patches = x_img.reshape(B, c_in, gh, p, gw, p).transpose(0, 2, 4, 1, 3, 5)
    patches = patches.reshape(B * n_patches, c_in * p * p)
    tokens = _patch_embed(patches, params['w_pe'], params['b_pe'])     # (B*P, E)
    tokens = tokens.reshape(B, n_patches, E)

    # cls token + positional embedding (trivial layout / elementwise glue). pos_drop p=0.
    cls_tok = jnp.broadcast_to(params['cls_token'], (B, 1, E))
    x = jnp.concatenate([cls_tok, tokens], axis=1) + params['pos_embed']

    # Pad token dim to a multiple of 16 (bf16 sublane tile); padded keys masked in-kernel.
    n_valid = n_patches + 1
    n_pad = _round_up(n_valid, 16)
    x = jnp.pad(x, ((0, 0), (0, n_pad - n_valid), (0, 0)))

    # bf16 residual stream on bandwidth-limited v5e, f32 elsewhere.
    if residual_dtype is None:
        residual_dtype = jnp.bfloat16 if _is_v5e_chip() else jnp.float32
    x = x.astype(residual_dtype)

    if block_b is None:
        block_b = _pick_block_b(B)

    for blk in params['blocks']:
        x = _transformer_block(x, blk, num_heads=num_heads,
                               n_valid=n_valid, block_b=block_b)

    cls = x[:, 0, :]                                                   # pre_logits = Identity
    return _norm_head(cls, params['norm_g'], params['norm_b'],
                      params['w_head'], params['b_head'])


# ---------------------------------------------------------------------------
# Parameters (synthetic, deterministic) and pure-JAX reference
# ---------------------------------------------------------------------------
def init_params(key, *, img_size, patch_size, in_chans, embed_dim, depth,
                num_heads, mlp_ratio, num_classes):
    E = embed_dim
    Hd = int(E * mlp_ratio)
    P = (img_size // patch_size) ** 2
    K = in_chans * patch_size * patch_size
    keys = jax.random.split(key, 8 + depth)

    def rnd(k, shape, s=0.05):
        return jax.random.normal(k, shape, dtype=jnp.float32) * s

    params = dict(
        w_pe=rnd(keys[0], (K, E)).astype(jnp.bfloat16),       # conv weight, pre-flattened (in, out)
        b_pe=rnd(keys[1], (1, E)),
        cls_token=rnd(keys[2], (1, 1, E)),
        pos_embed=rnd(keys[3], (1, P + 1, E)),
        norm_g=1.0 + rnd(keys[4], (1, E), 0.1),
        norm_b=rnd(keys[5], (1, E), 0.1),
        w_head=rnd(keys[6], (E, num_classes)).astype(jnp.bfloat16),
        b_head=rnd(keys[7], (1, num_classes)),
        blocks=[],
    )
    for d in range(depth):
        bk = jax.random.split(keys[8 + d], 12)
        params['blocks'].append(dict(
            ln1_g=1.0 + rnd(bk[0], (1, E), 0.1),
            ln1_b=rnd(bk[1], (1, E), 0.1),
            w_qkv=rnd(bk[2], (E, 3 * E)).astype(jnp.bfloat16),
            b_qkv=rnd(bk[3], (1, 3 * E)),                      # qkv_bias=True (DeiT default)
            w_proj=rnd(bk[4], (E, E)).astype(jnp.bfloat16),
            b_proj=rnd(bk[5], (1, E)),
            ln2_g=1.0 + rnd(bk[6], (1, E), 0.1),
            ln2_b=rnd(bk[7], (1, E), 0.1),
            w_fc1=rnd(bk[8], (E, Hd)).astype(jnp.bfloat16),
            b_fc1=rnd(bk[9], (1, Hd)),
            w_fc2=rnd(bk[10], (Hd, E)).astype(jnp.bfloat16),
            b_fc2=rnd(bk[11], (1, E)),
        ))
    return params


def deit_ref(x_img, params, *, patch_size, num_heads):
    """Pure-JAX f32 reference mirroring the PyTorch DeiT forward."""
    f32 = lambda a: a.astype(jnp.float32)
    B, c_in, hs, ws = x_img.shape
    p = patch_size
    gh, gw = hs // p, ws // p
    P = gh * gw
    E = params['b_pe'].shape[-1]
    dh = E // num_heads

    def ln(v, g, b):
        mu = jnp.mean(v, axis=-1, keepdims=True)
        var = jnp.mean((v - mu) ** 2, axis=-1, keepdims=True)
        return (v - mu) * lax.rsqrt(var + LN_EPS) * g + b

    patches = x_img.reshape(B, c_in, gh, p, gw, p).transpose(0, 2, 4, 1, 3, 5)
    patches = patches.reshape(B, P, c_in * p * p)
    tokens = patches @ f32(params['w_pe']) + params['b_pe']
    cls_tok = jnp.broadcast_to(params['cls_token'], (B, 1, E))
    x = jnp.concatenate([cls_tok, tokens], axis=1) + params['pos_embed']
    N = P + 1

    for blk in params['blocks']:
        h = ln(x, blk['ln1_g'], blk['ln1_b'])
        qkv = h @ f32(blk['w_qkv']) + blk['b_qkv']
        qkv = qkv.reshape(B, N, 3, num_heads, dh).transpose(2, 0, 3, 1, 4)
        q, k, v = qkv[0], qkv[1], qkv[2]                      # (B, H, N, dh)
        attn = jnp.einsum('bhqd,bhkd->bhqk', q, k) * (dh ** -0.5)
        attn = jax.nn.softmax(attn, axis=-1)
        ctx = jnp.einsum('bhqk,bhkd->bhqd', attn, v)
        ctx = ctx.transpose(0, 2, 1, 3).reshape(B, N, E)
        x = x + (ctx @ f32(blk['w_proj']) + blk['b_proj'])
        h = ln(x, blk['ln2_g'], blk['ln2_b'])
        h = _gelu(h @ f32(blk['w_fc1']) + blk['b_fc1'])
        x = x + (h @ f32(blk['w_fc2']) + blk['b_fc2'])

    x = ln(x, params['norm_g'], params['norm_b'])
    return x[:, 0] @ f32(params['w_head']) + params['b_head']


if __name__ == "__main__":
    B = 2
    img_size, patch_size, in_chans = 16, 8, 3
    embed_dim, depth, num_heads = 32, 2, 4
    mlp_ratio, num_classes = 4.0, 10

    # Prime hardware probes eagerly (outside any jit trace).
    _phys_vmem_bytes()
    _buffered_weights_supported()

    key = jax.random.PRNGKey(0)
    kx, kp = jax.random.split(key)
    x_img = jax.random.normal(kx, (B, in_chans, img_size, img_size), dtype=jnp.float32)
    params = init_params(kp, img_size=img_size, patch_size=patch_size,
                         in_chans=in_chans, embed_dim=embed_dim, depth=depth,
                         num_heads=num_heads, mlp_ratio=mlp_ratio,
                         num_classes=num_classes)

    fwd = jax.jit(functools.partial(deit_forward, patch_size=patch_size,
                                    num_heads=num_heads))
    out = jax.block_until_ready(fwd(x_img, params))

    ref = deit_ref(x_img, params, patch_size=patch_size, num_heads=num_heads)
    assert out.shape == (B, num_classes)
    # bf16 MXU inputs + approx reciprocal vs the f32 reference -> ~1e-2 agreement
    # (slightly looser when the residual stream is stored bf16 on v5e).
    tol = 6e-2 if _is_v5e_chip() else 3e-2
    assert jnp.allclose(out, ref, atol=tol, rtol=tol), "mismatch vs reference"

    print("KERNEL_OK")
</pallas_src>

<mosaic_0001>
module attributes {stable_mosaic.version = 11 : i64} {
  func.func @_patch_embed_kernel(%arg0: i32, %arg1: memref<8x192xf32, #tpu.memory_space<vmem>>, %arg2: memref<192x32xbf16, #tpu.memory_space<vmem>>, %arg3: memref<1x32xf32, #tpu.memory_space<vmem>>, %arg4: memref<8x32xf32, #tpu.memory_space<vmem>>) attributes {dimension_semantics = [#tpu.dimension_semantics<parallel>], iteration_bounds = array<i64: 1>, scalar_prefetch = 0 : i64, scratch_operands = 0 : i64, tpu.core_type = #tpu.core_type<tc>, window_params = [{transform_indices = @transform_0, window_bounds = array<i64: 8, 192>}, {pipeline_mode = #tpu.pipeline_mode<synchronous>, transform_indices = @transform_1, window_bounds = array<i64: 192, 32>}, {pipeline_mode = #tpu.pipeline_mode<synchronous>, transform_indices = @transform_2, window_bounds = array<i64: 1, 32>}, {transform_indices = @transform_3, window_bounds = array<i64: 8, 32>}]} {
    %c0 = arith.constant 0 : index
    %c0_0 = arith.constant 0 : index
    %0 = vector.load %arg1[%c0, %c0_0] : memref<8x192xf32, #tpu.memory_space<vmem>>, vector<8x192xf32>
    %1 = arith.truncf %0 : vector<8x192xf32> to vector<8x192xbf16>
    %c0_1 = arith.constant 0 : index
    %c0_2 = arith.constant 0 : index
    %2 = vector.load %arg2[%c0_1, %c0_2] : memref<192x32xbf16, #tpu.memory_space<vmem>>, vector<192x32xbf16>
    %cst = arith.constant dense<0.000000e+00> : vector<8x32xf32>
    %3 = tpu.matmul %1, %2, %cst {dimension_numbers = #tpu.dot_dimension_numbers<[1], [0], [0], [1], [0, 0, 1, 1], [], []>} : vector<8x192xbf16>, vector<192x32xbf16>, vector<8x32xf32> -> vector<8x32xf32>
    %c0_3 = arith.constant 0 : index
    %c0_4 = arith.constant 0 : index
    %4 = vector.load %arg3[%c0_3, %c0_4] : memref<1x32xf32, #tpu.memory_space<vmem>>, vector<1x32xf32>
    %5 = vector.broadcast %4 : vector<1x32xf32> to vector<8x32xf32>
    %6 = arith.addf %3, %5 : vector<8x32xf32>
    %c0_5 = arith.constant 0 : index
    %c0_6 = arith.constant 0 : index
    %7 = vector.load %arg4[%c0_5, %c0_6] : memref<8x32xf32, #tpu.memory_space<vmem>>, vector<8x32xf32>
    tpu.vector_store %arg4[%c0_5, %c0_6], %6 {strides = array<i32>} : memref<8x32xf32, #tpu.memory_space<vmem>>, vector<8x32xf32>,
    return
  }
  func.func @transform_0(%arg0: i32) -> (i32, i32) {
    %c0_i32 = arith.constant 0 : i32
    %c0_i32_0 = arith.constant 0 : i32
    return %arg0, %c0_i32 : i32, i32
  }
  func.func @transform_1(%arg0: i32) -> (i32, i32) {
    %c0_i32 = arith.constant 0 : i32
    %c0_i32_0 = arith.constant 0 : i32
    %c0_i32_1 = arith.constant 0 : i32
    return %c0_i32, %c0_i32_0 : i32, i32
  }
  func.func @transform_2(%arg0: i32) -> (i32, i32) {
    %c0_i32 = arith.constant 0 : i32
    %c0_i32_0 = arith.constant 0 : i32
    %c0_i32_1 = arith.constant 0 : i32
    return %c0_i32, %c0_i32_0 : i32, i32
  }
  func.func @transform_3(%arg0: i32) -> (i32, i32) {
    %c0_i32 = arith.constant 0 : i32
    %c0_i32_0 = arith.constant 0 : i32
    return %arg0, %c0_i32 : i32, i32
  }
}

module attributes {stable_mosaic.version = 11 : i64} {
  func.func @_block_kernel(%arg0: i32, %arg1: memref<1x16x32xf32, #tpu.memory_space<vmem>>, %arg2: memref<1x32xf32, #tpu.memory_space<vmem>>, %arg3: memref<1x32xf32, #tpu.memory_space<vmem>>, %arg4: memref<32x96xbf16, #tpu.memory_space<vmem>>, %arg5: memref<1x96xf32, #tpu.memory_space<vmem>>, %arg6: memref<32x32xbf16, #tpu.memory_space<vmem>>, %arg7: memref<1x32xf32, #tpu.memory_space<vmem>>, %arg8: memref<1x32xf32, #tpu.memory_space<vmem>>, %arg9: memref<1x32xf32, #tpu.memory_space<vmem>>, %arg10: memref<32x128xbf16, #tpu.memory_space<vmem>>, %arg11: memref<1x128xf32, #tpu.memory_space<vmem>>, %arg12: memref<128x32xbf16, #tpu.memory_space<vmem>>, %arg13: memref<1x32xf32, #tpu.memory_space<vmem>>, %arg14: memref<1x16x32xf32, #tpu.memory_space<vmem>>) attributes {dimension_semantics = [#tpu.dimension_semantics<parallel>], iteration_bounds = array<i64: 2>, scalar_prefetch = 0 : i64, scratch_operands = 0 : i64, tpu.core_type = #tpu.core_type<tc>, window_params = [{transform_indices = @transform_0, window_bounds = array<i64: 1, 16, 32>}, {pipeline_mode = #tpu.pipeline_mode<synchronous>, transform_indices = @transform_1, window_bounds = array<i64: 1, 32>}, {pipeline_mode = #tpu.pipeline_mode<synchronous>, transform_indices = @transform_2, window_bounds = array<i64: 1, 32>}, {pipeline_mode = #tpu.pipeline_mode<synchronous>, transform_indices = @transform_3, window_bounds = array<i64: 32, 96>}, {pipeline_mode = #tpu.pipeline_mode<synchronous>, transform_indices = @transform_4, window_bounds = array<i64: 1, 96>}, {pipeline_mode = #tpu.pipeline_mode<synchronous>, transform_indices = @transform_5, window_bounds = array<i64: 32, 32>}, {pipeline_mode = #tpu.pipeline_mode<synchronous>, transform_indices = @transform_6, window_bounds = array<i64: 1, 32>}, {pipeline_mode = #tpu.pipeline_mode<synchronous>, transform_indices = @transform_7, window_bounds = array<i64: 1, 32>}, {pipeline_mode = #tpu.pipeline_mode<synchronous>, transform_indices = @transform_8, window_bounds = array<i64: 1, 32>}, {pipeline_mode = #tpu.pipeline_mode<synchronous>, transform_indices = @transform_9, window_bounds = array<i64: 32, 128>}, {pipeline_mode = #tpu.pipeline_mode<synchronous>, transform_indices = @transform_10, window_bounds = array<i64: 1, 128>}, {pipeline_mode = #tpu.pipeline_mode<synchronous>, transform_indices = @transform_11, window_bounds = array<i64: 128, 32>}, {pipeline_mode = #tpu.pipeline_mode<synchronous>, transform_indices = @transform_12, window_bounds = array<i64: 1, 32>}, {transform_indices = @transform_13, window_bounds = array<i64: 1, 16, 32>}]} {
    %c0 = arith.constant 0 : index
    %c0_0 = arith.constant 0 : index
    %c0_1 = arith.constant 0 : index
    %0 = vector.load %arg1[%c0, %c0_0, %c0_1] : memref<1x16x32xf32, #tpu.memory_space<vmem>>, vector<1x16x32xf32>
    %1 = vector.shape_cast %0 : vector<1x16x32xf32> to vector<16x32xf32>
    %c0_2 = arith.constant 0 : index
    %c0_3 = arith.constant 0 : index
    %2 = vector.load %arg2[%c0_2, %c0_3] : memref<1x32xf32, #tpu.memory_space<vmem>>, vector<1x32xf32>
    %c0_4 = arith.constant 0 : index
    %c0_5 = arith.constant 0 : index
    %3 = vector.load %arg3[%c0_4, %c0_5] : memref<1x32xf32, #tpu.memory_space<vmem>>, vector<1x32xf32>
    %cst = arith.constant dense<0.000000e+00> : vector<16xf32>
    %4 = vector.multi_reduction <add>, %1, %cst [1] : vector<16x32xf32> to vector<16xf32>
    %5 = vector.shape_cast %4 : vector<16xf32> to vector<16x1xf32>
    %cst_6 = arith.constant 3.200000e+01 : f32
    %6 = vector.broadcast %cst_6 : f32 to vector<16x1xf32>
    %7 = arith.divf %5, %6 : vector<16x1xf32>
    %8 = vector.broadcast %7 : vector<16x1xf32> to vector<16x32xf32>
    %9 = arith.subf %1, %8 : vector<16x32xf32>
    %10 = arith.mulf %9, %9 : vector<16x32xf32>
    %cst_7 = arith.constant dense<0.000000e+00> : vector<16xf32>
    %11 = vector.multi_reduction <add>, %10, %cst_7 [1] : vector<16x32xf32> to vector<16xf32>
    %12 = vector.shape_cast %11 : vector<16xf32> to vector<16x1xf32>
    %cst_8 = arith.constant 3.200000e+01 : f32
    %13 = vector.broadcast %cst_8 : f32 to vector<16x1xf32>
    %14 = arith.divf %12, %13 : vector<16x1xf32>
    %cst_9 = arith.constant 9.99999974E-6 : f32
    %15 = vector.broadcast %cst_9 : f32 to vector<16x1xf32>
    %16 = arith.addf %14, %15 : vector<16x1xf32>
    %17 = math.rsqrt %16 : vector<16x1xf32>
    %18 = vector.broadcast %17 : vector<16x1xf32> to vector<16x32xf32>
    %19 = arith.mulf %9, %18 : vector<16x32xf32>
    %20 = vector.broadcast %2 : vector<1x32xf32> to vector<16x32xf32>
    %21 = arith.mulf %19, %20 : vector<16x32xf32>
    %22 = vector.broadcast %3 : vector<1x32xf32> to vector<16x32xf32>
    %23 = arith.addf %21, %22 : vector<16x32xf32>
    %24 = arith.truncf %23 : vector<16x32xf32> to vector<16x32xbf16>
    %c0_10 = arith.constant 0 : index
    %c0_11 = arith.constant 0 : index
    %25 = vector.load %arg4[%c0_10, %c0_11] : memref<32x96xbf16, #tpu.memory_space<vmem>>, vector<32x96xbf16>
    %cst_12 = arith.constant dense<0.000000e+00> : vector<16x96xf32>
    %26 = tpu.matmul %24, %25, %cst_12 {dimension_numbers = #tpu.dot_dimension_numbers<[1], [0], [0], [1], [0, 0, 1, 1], [], []>} : vector<16x32xbf16>, vector<32x96xbf16>, vector<16x96xf32> -> vector<16x96xf32>
    %c0_13 = arith.constant 0 : index
    %c0_14 = arith.constant 0 : index
    %27 = vector.load %arg5[%c0_13, %c0_14] : memref<1x96xf32, #tpu.memory_space<vmem>>, vector<1x96xf32>
    %28 = vector.broadcast %27 : vector<1x96xf32> to vector<16x96xf32>
    %29 = arith.addf %26, %28 : vector<16x96xf32>
    %30 = arith.truncf %29 : vector<16x96xf32> to vector<16x96xbf16>
    %31 = vector.shape_cast %30 : vector<16x96xbf16> to vector<1x16x96xbf16>
    %32 = vector.extract_strided_slice %31 {offsets = [0, 0, 0], sizes = [1, 16, 8], strides = [1, 1, 1]} : vector<1x16x96xbf16> to vector<1x16x8xbf16>
    %33 = vector.extract_strided_slice %31 {offsets = [0, 0, 32], sizes = [1, 16, 8], strides = [1, 1, 1]} : vector<1x16x96xbf16> to vector<1x16x8xbf16>
    %34 = vector.extract_strided_slice %31 {offsets = [0, 0, 64], sizes = [1, 16, 8], strides = [1, 1, 1]} : vector<1x16x96xbf16> to vector<1x16x8xbf16>
    %35 = vector.extract_strided_slice %31 {offsets = [0, 0, 8], sizes = [1, 16, 8], strides = [1, 1, 1]} : vector<1x16x96xbf16> to vector<1x16x8xbf16>
    %36 = vector.extract_strided_slice %31 {offsets = [0, 0, 40], sizes = [1, 16, 8], strides = [1, 1, 1]} : vector<1x16x96xbf16> to vector<1x16x8xbf16>
    %37 = vector.extract_strided_slice %31 {offsets = [0, 0, 72], sizes = [1, 16, 8], strides = [1, 1, 1]} : vector<1x16x96xbf16> to vector<1x16x8xbf16>
    %38 = vector.extract_strided_slice %31 {offsets = [0, 0, 16], sizes = [1, 16, 8], strides = [1, 1, 1]} : vector<1x16x96xbf16> to vector<1x16x8xbf16>
    %39 = vector.extract_strided_slice %31 {offsets = [0, 0, 48], sizes = [1, 16, 8], strides = [1, 1, 1]} : vector<1x16x96xbf16> to vector<1x16x8xbf16>
    %40 = vector.extract_strided_slice %31 {offsets = [0, 0, 80], sizes = [1, 16, 8], strides = [1, 1, 1]} : vector<1x16x96xbf16> to vector<1x16x8xbf16>
    %41 = vector.extract_strided_slice %31 {offsets = [0, 0, 24], sizes = [1, 16, 8], strides = [1, 1, 1]} : vector<1x16x96xbf16> to vector<1x16x8xbf16>
    %42 = vector.extract_strided_slice %31 {offsets = [0, 0, 56], sizes = [1, 16, 8], strides = [1, 1, 1]} : vector<1x16x96xbf16> to vector<1x16x8xbf16>
    %43 = vector.extract_strided_slice %31 {offsets = [0, 0, 88], sizes = [1, 16, 8], strides = [1, 1, 1]} : vector<1x16x96xbf16> to vector<1x16x8xbf16>
    %44 = vector.shape_cast %32 : vector<1x16x8xbf16> to vector<1x1x16x8xbf16>
    %45 = vector.shape_cast %35 : vector<1x16x8xbf16> to vector<1x1x16x8xbf16>
    %46 = vector.shape_cast %38 : vector<1x16x8xbf16> to vector<1x1x16x8xbf16>
    %47 = vector.shape_cast %41 : vector<1x16x8xbf16> to vector<1x1x16x8xbf16>
    %48 = tpu.concatenate %44, %45, %46, %47 in 1 : vector<1x1x16x8xbf16>, vector<1x1x16x8xbf16>, vector<1x1x16x8xbf16>, vector<1x1x16x8xbf16> -> vector<1x4x16x8xbf16>
    %49 = vector.shape_cast %48 : vector<1x4x16x8xbf16> to vector<4x16x8xbf16>
    %50 = vector.shape_cast %33 : vector<1x16x8xbf16> to vector<1x1x16x8xbf16>
    %51 = vector.shape_cast %36 : vector<1x16x8xbf16> to vector<1x1x16x8xbf16>
    %52 = vector.shape_cast %39 : vector<1x16x8xbf16> to vector<1x1x16x8xbf16>
    %53 = vector.shape_cast %42 : vector<1x16x8xbf16> to vector<1x1x16x8xbf16>
    %54 = tpu.concatenate %50, %51, %52, %53 in 1 : vector<1x1x16x8xbf16>, vector<1x1x16x8xbf16>, vector<1x1x16x8xbf16>, vector<1x1x16x8xbf16> -> vector<1x4x16x8xbf16>
    %55 = vector.shape_cast %54 : vector<1x4x16x8xbf16> to vector<4x16x8xbf16>
    %56 = vector.shape_cast %34 : vector<1x16x8xbf16> to vector<1x1x16x8xbf16>
    %57 = vector.shape_cast %37 : vector<1x16x8xbf16> to vector<1x1x16x8xbf16>
    %58 = vector.shape_cast %40 : vector<1x16x8xbf16> to vector<1x1x16x8xbf16>
    %59 = vector.shape_cast %43 : vector<1x16x8xbf16> to vector<1x1x16x8xbf16>
    %60 = tpu.concatenate %56, %57, %58, %59 in 1 : vector<1x1x16x8xbf16>, vector<1x1x16x8xbf16>, vector<1x1x16x8xbf16>, vector<1x1x16x8xbf16> -> vector<1x4x16x8xbf16>
    %61 = vector.shape_cast %60 : vector<1x4x16x8xbf16> to vector<4x16x8xbf16>
    "tpu.trace_start"() <{level = 10 : i32, message = "zqd,zkd->zqk"}> : () -> ()
    %cst_15 = arith.constant dense<0.000000e+00> : vector<4x16x16xf32>
    %62 = tpu.matmul %49, %55, %cst_15 {dimension_numbers = #tpu.dot_dimension_numbers<[2], [2], [1], [1], [0, 0, 0, 1, 1, 1], [0], [0]>} : vector<4x16x8xbf16>, vector<4x16x8xbf16>, vector<4x16x16xf32> -> vector<4x16x16xf32>
    "tpu.trace_stop"() : () -> ()
    %63 = tpu.iota {dimensions = array<i32: 2>} : vector<1x1x16xi32>
    %c5_i32 = arith.constant 5 : i32
    %64 = vector.broadcast %c5_i32 : i32 to vector<1x1x16xi32>
    %65 = arith.cmpi slt, %63, %64 : vector<1x1x16xi32>
    %cst_16 = arith.constant -1.000000e+30 : f32
    %66 = vector.shape_cast %65 : vector<1x1x16xi1> to vector<1x1x16xi1>
    %67 = vector.broadcast %66 : vector<1x1x16xi1> to vector<4x16x16xi1>
    %68 = vector.broadcast %cst_16 : f32 to vector<4x16x16xf32>
    %69 = arith.select %67, %62, %68 : vector<4x16x16xi1>, vector<4x16x16xf32>
    %cst_17 = arith.constant dense<0xFF800000> : vector<4x16xf32>
    %70 = vector.multi_reduction <maximumf>, %69, %cst_17 [2] : vector<4x16x16xf32> to vector<4x16xf32>
    %71 = vector.shape_cast %70 : vector<4x16xf32> to vector<4x16x1xf32>
    %72 = vector.broadcast %71 : vector<4x16x1xf32> to vector<4x16x16xf32>
    %73 = arith.subf %69, %72 : vector<4x16x16xf32>
    %74 = math.exp %73 : vector<4x16x16xf32>
    %cst_18 = arith.constant dense<0.000000e+00> : vector<4x16xf32>
    %75 = vector.multi_reduction <add>, %74, %cst_18 [2] : vector<4x16x16xf32> to vector<4x16xf32>
    %76 = vector.shape_cast %75 : vector<4x16xf32> to vector<4x16x1xf32>
    %77 = tpu.reciprocal %76 {approx = true} : vector<4x16x1xf32> -> vector<4x16x1xf32>
    %78 = vector.broadcast %77 : vector<4x16x1xf32> to vector<4x16x16xf32>
    %79 = arith.mulf %74, %78 : vector<4x16x16xf32>
    %80 = arith.truncf %79 : vector<4x16x16xf32> to vector<4x16x16xbf16>
    "tpu.trace_start"() <{level = 10 : i32, message = "zqk,zkd->zqd"}> : () -> ()
    %cst_19 = arith.constant dense<0.000000e+00> : vector<4x16x8xf32>
    %81 = tpu.matmul %80, %61, %cst_19 {dimension_numbers = #tpu.dot_dimension_numbers<[2], [1], [1], [2], [0, 0, 0, 1, 1, 2], [0], [0]>} : vector<4x16x16xbf16>, vector<4x16x8xbf16>, vector<4x16x8xf32> -> vector<4x16x8xf32>
    "tpu.trace_stop"() : () -> ()
    %82 = arith.truncf %81 : vector<4x16x8xf32> to vector<4x16x8xbf16>
    %83 = vector.shape_cast %82 : vector<4x16x8xbf16> to vector<1x4x16x8xbf16>
    %84 = vector.extract_strided_slice %83 {offsets = [0, 0, 0, 0], sizes = [1, 1, 16, 8], strides = [1, 1, 1, 1]} : vector<1x4x16x8xbf16> to vector<1x1x16x8xbf16>
    %85 = vector.shape_cast %84 : vector<1x1x16x8xbf16> to vector<1x16x8xbf16>
    %86 = vector.extract_strided_slice %83 {offsets = [0, 1, 0, 0], sizes = [1, 1, 16, 8], strides = [1, 1, 1, 1]} : vector<1x4x16x8xbf16> to vector<1x1x16x8xbf16>
    %87 = vector.shape_cast %86 : vector<1x1x16x8xbf16> to vector<1x16x8xbf16>
    %88 = vector.extract_strided_slice %83 {offsets = [0, 2, 0, 0], sizes = [1, 1, 16, 8], strides = [1, 1, 1, 1]} : vector<1x4x16x8xbf16> to vector<1x1x16x8xbf16>
    %89 = vector.shape_cast %88 : vector<1x1x16x8xbf16> to vector<1x16x8xbf16>
    %90 = vector.extract_strided_slice %83 {offsets = [0, 3, 0, 0], sizes = [1, 1, 16, 8], strides = [1, 1, 1, 1]} : vector<1x4x16x8xbf16> to vector<1x1x16x8xbf16>
    %91 = vector.shape_cast %90 : vector<1x1x16x8xbf16> to vector<1x16x8xbf16>
    %92 = tpu.concatenate %85, %87, %89, %91 in 2 : vector<1x16x8xbf16>, vector<1x16x8xbf16>, vector<1x16x8xbf16>, vector<1x16x8xbf16> -> vector<1x16x32xbf16>
    %93 = vector.shape_cast %92 : vector<1x16x32xbf16> to vector<16x32xbf16>
    %c0_20 = arith.constant 0 : index
    %c0_21 = arith.constant 0 : index
    %94 = vector.load %arg6[%c0_20, %c0_21] : memref<32x32xbf16, #tpu.memory_space<vmem>>, vector<32x32xbf16>
    %cst_22 = arith.constant dense<0.000000e+00> : vector<16x32xf32>
    %95 = tpu.matmul %93, %94, %cst_22 {dimension_numbers = #tpu.dot_dimension_numbers<[1], [0], [0], [1], [0, 0, 1, 1], [], []>} : vector<16x32xbf16>, vector<32x32xbf16>, vector<16x32xf32> -> vector<16x32xf32>
    %c0_23 = arith.constant 0 : index
    %c0_24 = arith.constant 0 : index
    %96 = vector.load %arg7[%c0_23, %c0_24] : memref<1x32xf32, #tpu.memory_space<vmem>>, vector<1x32xf32>
    %97 = vector.broadcast %96 : vector<1x32xf32> to vector<16x32xf32>
    %98 = arith.addf %95, %97 : vector<16x32xf32>
    %99 = arith.addf %1, %98 : vector<16x32xf32>
    %c0_25 = arith.constant 0 : index
    %c0_26 = arith.constant 0 : index
    %100 = vector.load %arg8[%c0_25, %c0_26] : memref<1x32xf32, #tpu.memory_space<vmem>>, vector<1x32xf32>
    %c0_27 = arith.constant 0 : index
    %c0_28 = arith.constant 0 : index
    %101 = vector.load %arg9[%c0_27, %c0_28] : memref<1x32xf32, #tpu.memory_space<vmem>>, vector<1x32xf32>
    %cst_29 = arith.constant dense<0.000000e+00> : vector<16xf32>
    %102 = vector.multi_reduction <add>, %99, %cst_29 [1] : vector<16x32xf32> to vector<16xf32>
    %103 = vector.shape_cast %102 : vector<16xf32> to vector<16x1xf32>
    %cst_30 = arith.constant 3.200000e+01 : f32
    %104 = vector.broadcast %cst_30 : f32 to vector<16x1xf32>
    %105 = arith.divf %103, %104 : vector<16x1xf32>
    %106 = vector.broadcast %105 : vector<16x1xf32> to vector<16x32xf32>
    %107 = arith.subf %99, %106 : vector<16x32xf32>
    %108 = arith.mulf %107, %107 : vector<16x32xf32>
    %cst_31 = arith.constant dense<0.000000e+00> : vector<16xf32>
    %109 = vector.multi_reduction <add>, %108, %cst_31 [1] : vector<16x32xf32> to vector<16xf32>
    %110 = vector.shape_cast %109 : vector<16xf32> to vector<16x1xf32>
    %cst_32 = arith.constant 3.200000e+01 : f32
    %111 = vector.broadcast %cst_32 : f32 to vector<16x1xf32>
    %112 = arith.divf %110, %111 : vector<16x1xf32>
    %cst_33 = arith.constant 9.99999974E-6 : f32
    %113 = vector.broadcast %cst_33 : f32 to vector<16x1xf32>
    %114 = arith.addf %112, %113 : vector<16x1xf32>
    %115 = math.rsqrt %114 : vector<16x1xf32>
    %116 = vector.broadcast %115 : vector<16x1xf32> to vector<16x32xf32>
    %117 = arith.mulf %107, %116 : vector<16x32xf32>
    %118 = vector.broadcast %100 : vector<1x32xf32> to vector<16x32xf32>
    %119 = arith.mulf %117, %118 : vector<16x32xf32>
    %120 = vector.broadcast %101 : vector<1x32xf32> to vector<16x32xf32>
    %121 = arith.addf %119, %120 : vector<16x32xf32>
    %122 = arith.truncf %121 : vector<16x32xf32> to vector<16x32xbf16>
    %c0_34 = arith.constant 0 : index
    %c0_35 = arith.constant 0 : index
    %123 = vector.load %arg10[%c0_34, %c0_35] : memref<32x128xbf16, #tpu.memory_space<vmem>>, vector<32x128xbf16>
    %cst_36 = arith.constant dense<0.000000e+00> : vector<16x128xf32>
    %124 = tpu.matmul %122, %123, %cst_36 {dimension_numbers = #tpu.dot_dimension_numbers<[1], [0], [0], [1], [0, 0, 1, 1], [], []>} : vector<16x32xbf16>, vector<32x128xbf16>, vector<16x128xf32> -> vector<16x128xf32>
    %c0_37 = arith.constant 0 : index
    %c0_38 = arith.constant 0 : index
    %125 = vector.load %arg11[%c0_37, %c0_38] : memref<1x128xf32, #tpu.memory_space<vmem>>, vector<1x128xf32>
    %126 = vector.broadcast %125 : vector<1x128xf32> to vector<16x128xf32>
    %127 = arith.addf %124, %126 : vector<16x128xf32>
    %cst_39 = arith.constant 5.000000e-01 : f32
    %128 = vector.broadcast %cst_39 : f32 to vector<16x128xf32>
    %129 = arith.mulf %128, %127 : vector<16x128xf32>
    %cst_40 = arith.constant 4.471500e-02 : f32
    %130 = vector.broadcast %cst_40 : f32 to vector<16x128xf32>
    %131 = arith.mulf %130, %127 : vector<16x128xf32>
    %132 = arith.mulf %131, %127 : vector<16x128xf32>
    %133 = arith.mulf %132, %127 : vector<16x128xf32>
    %134 = arith.addf %127, %133 : vector<16x128xf32>
    %cst_41 = arith.constant 0.797884583 : f32
    %135 = vector.broadcast %cst_41 : f32 to vector<16x128xf32>
    %136 = arith.mulf %135, %134 : vector<16x128xf32>
    %137 = math.tanh %136 : vector<16x128xf32>
    %cst_42 = arith.constant 1.000000e+00 : f32
    %138 = vector.broadcast %cst_42 : f32 to vector<16x128xf32>
    %139 = arith.addf %138, %137 : vector<16x128xf32>
    %140 = arith.mulf %129, %139 : vector<16x128xf32>
    %141 = arith.truncf %140 : vector<16x128xf32> to vector<16x128xbf16>
    %c0_43 = arith.constant 0 : index
    %c0_44 = arith.constant 0 : index
    %142 = vector.load %arg12[%c0_43, %c0_44] : memref<128x32xbf16, #tpu.memory_space<vmem>>, vector<128x32xbf16>
    %cst_45 = arith.constant dense<0.000000e+00> : vector<16x32xf32>
    %143 = tpu.matmul %141, %142, %cst_45 {dimension_numbers = #tpu.dot_dimension_numbers<[1], [0], [0], [1], [0, 0, 1, 1], [], []>} : vector<16x128xbf16>, vector<128x32xbf16>, vector<16x32xf32> -> vector<16x32xf32>
    %c0_46 = arith.constant 0 : index
    %c0_47 = arith.constant 0 : index
    %144 = vector.load %arg13[%c0_46, %c0_47] : memref<1x32xf32, #tpu.memory_space<vmem>>, vector<1x32xf32>
    %145 = vector.broadcast %144 : vector<1x32xf32> to vector<16x32xf32>
    %146 = arith.addf %143, %145 : vector<16x32xf32>
    %147 = arith.addf %99, %146 : vector<16x32xf32>
    %148 = vector.shape_cast %147 : vector<16x32xf32> to vector<1x16x32xf32>
    %c0_48 = arith.constant 0 : index
    %c0_49 = arith.constant 0 : index
    %c0_50 = arith.constant 0 : index
    %149 = vector.load %arg14[%c0_48, %c0_49, %c0_50] : memref<1x16x32xf32, #tpu.memory_space<vmem>>, vector<1x16x32xf32>
    tpu.vector_store %arg14[%c0_48, %c0_49, %c0_50], %148 {strides = array<i32>} : memref<1x16x32xf32, #tpu.memory_space<vmem>>, vector<1x16x32xf32>,
    return
  }
  func.func @transform_0(%arg0: i32) -> (i32, i32, i32) {
    %c0_i32 = arith.constant 0 : i32
    %c0_i32_0 = arith.constant 0 : i32
    %c0_i32_1 = arith.constant 0 : i32
    return %arg0, %c0_i32, %c0_i32_0 : i32, i32, i32
  }
  func.func @transform_1(%arg0: i32) -> (i32, i32) {
    %c0_i32 = arith.constant 0 : i32
    %c0_i32_0 = arith.constant 0 : i32
    %c0_i32_1 = arith.constant 0 : i32
    return %c0_i32, %c0_i32_0 : i32, i32
  }
  func.func @transform_2(%arg0: i32) -> (i32, i32) {
    %c0_i32 = arith.constant 0 : i32
    %c0_i32_0 = arith.constant 0 : i32
    %c0_i32_1 = arith.constant 0 : i32
    return %c0_i32, %c0_i32_0 : i32, i32
  }
  func.func @transform_3(%arg0: i32) -> (i32, i32) {
    %c0_i32 = arith.constant 0 : i32
    %c0_i32_0 = arith.constant 0 : i32
    %c0_i32_1 = arith.constant 0 : i32
    return %c0_i32, %c0_i32_0 : i32, i32
  }
  func.func @transform_4(%arg0: i32) -> (i32, i32) {
    %c0_i32 = arith.constant 0 : i32
    %c0_i32_0 = arith.constant 0 : i32
    %c0_i32_1 = arith.constant 0 : i32
    return %c0_i32, %c0_i32_0 : i32, i32
  }
  func.func @transform_5(%arg0: i32) -> (i32, i32) {
    %c0_i32 = arith.constant 0 : i32
    %c0_i32_0 = arith.constant 0 : i32
    %c0_i32_1 = arith.constant 0 : i32
    return %c0_i32, %c0_i32_0 : i32, i32
  }
  func.func @transform_6(%arg0: i32) -> (i32, i32) {
    %c0_i32 = arith.constant 0 : i32
    %c0_i32_0 = arith.constant 0 : i32
    %c0_i32_1 = arith.constant 0 : i32
    return %c0_i32, %c0_i32_0 : i32, i32
  }
  func.func @transform_7(%arg0: i32) -> (i32, i32) {
    %c0_i32 = arith.constant 0 : i32
    %c0_i32_0 = arith.constant 0 : i32
    %c0_i32_1 = arith.constant 0 : i32
    return %c0_i32, %c0_i32_0 : i32, i32
  }
  func.func @transform_8(%arg0: i32) -> (i32, i32) {
    %c0_i32 = arith.constant 0 : i32
    %c0_i32_0 = arith.constant 0 : i32
    %c0_i32_1 = arith.constant 0 : i32
    return %c0_i32, %c0_i32_0 : i32, i32
  }
  func.func @transform_9(%arg0: i32) -> (i32, i32) {
    %c0_i32 = arith.constant 0 : i32
    %c0_i32_0 = arith.constant 0 : i32
    %c0_i32_1 = arith.constant 0 : i32
    return %c0_i32, %c0_i32_0 : i32, i32
  }
  func.func @transform_10(%arg0: i32) -> (i32, i32) {
    %c0_i32 = arith.constant 0 : i32
    %c0_i32_0 = arith.constant 0 : i32
    %c0_i32_1 = arith.constant 0 : i32
    return %c0_i32, %c0_i32_0 : i32, i32
  }
  func.func @transform_11(%arg0: i32) -> (i32, i32) {
    %c0_i32 = arith.constant 0 : i32
    %c0_i32_0 = arith.constant 0 : i32
    %c0_i32_1 = arith.constant 0 : i32
    return %c0_i32, %c0_i32_0 : i32, i32
  }
  func.func @transform_12(%arg0: i32) -> (i32, i32) {
    %c0_i32 = arith.constant 0 : i32
    %c0_i32_0 = arith.constant 0 : i32
    %c0_i32_1 = arith.constant 0 : i32
    return %c0_i32, %c0_i32_0 : i32, i32
  }
  func.func @transform_13(%arg0: i32) -> (i32, i32, i32) {
    %c0_i32 = arith.constant 0 : i32
    %c0_i32_0 = arith.constant 0 : i32
    %c0_i32_1 = arith.constant 0 : i32
    return %arg0, %c0_i32, %c0_i32_0 : i32, i32, i32
  }
}

module attributes {stable_mosaic.version = 11 : i64} {
  func.func @_head_kernel(%arg0: i32, %arg1: memref<2x32xf32, #tpu.memory_space<vmem>>, %arg2: memref<1x32xf32, #tpu.memory_space<vmem>>, %arg3: memref<1x32xf32, #tpu.memory_space<vmem>>, %arg4: memref<32x128xbf16, #tpu.memory_space<vmem>>, %arg5: memref<1x128xf32, #tpu.memory_space<vmem>>, %arg6: memref<2x128xf32, #tpu.memory_space<vmem>>) attributes {dimension_semantics = [#tpu.dimension_semantics<arbitrary>], iteration_bounds = array<i64: 1>, scalar_prefetch = 0 : i64, scratch_operands = 0 : i64, tpu.core_type = #tpu.core_type<tc>, window_params = [{pipeline_mode = #tpu.pipeline_mode<synchronous>, transform_indices = @transform_0, window_bounds = array<i64: 2, 32>}, {pipeline_mode = #tpu.pipeline_mode<synchronous>, transform_indices = @transform_1, window_bounds = array<i64: 1, 32>}, {pipeline_mode = #tpu.pipeline_mode<synchronous>, transform_indices = @transform_2, window_bounds = array<i64: 1, 32>}, {pipeline_mode = #tpu.pipeline_mode<synchronous>, transform_indices = @transform_3, window_bounds = array<i64: 32, 128>}, {pipeline_mode = #tpu.pipeline_mode<synchronous>, transform_indices = @transform_4, window_bounds = array<i64: 1, 128>}, {pipeline_mode = #tpu.pipeline_mode<synchronous>, transform_indices = @transform_5, window_bounds = array<i64: 2, 128>}]} {
    %c0 = arith.constant 0 : index
    %c0_0 = arith.constant 0 : index
    %0 = vector.load %arg1[%c0, %c0_0] : memref<2x32xf32, #tpu.memory_space<vmem>>, vector<2x32xf32>
    %c0_1 = arith.constant 0 : index
    %c0_2 = arith.constant 0 : index
    %1 = vector.load %arg2[%c0_1, %c0_2] : memref<1x32xf32, #tpu.memory_space<vmem>>, vector<1x32xf32>
    %c0_3 = arith.constant 0 : index
    %c0_4 = arith.constant 0 : index
    %2 = vector.load %arg3[%c0_3, %c0_4] : memref<1x32xf32, #tpu.memory_space<vmem>>, vector<1x32xf32>
    %cst = arith.constant dense<0.000000e+00> : vector<2xf32>
    %3 = vector.multi_reduction <add>, %0, %cst [1] : vector<2x32xf32> to vector<2xf32>
    %4 = vector.shape_cast %3 : vector<2xf32> to vector<2x1xf32>
    %cst_5 = arith.constant 3.200000e+01 : f32
    %5 = vector.broadcast %cst_5 : f32 to vector<2x1xf32>
    %6 = arith.divf %4, %5 : vector<2x1xf32>
    %7 = vector.broadcast %6 : vector<2x1xf32> to vector<2x32xf32>
    %8 = arith.subf %0, %7 : vector<2x32xf32>
    %9 = arith.mulf %8, %8 : vector<2x32xf32>
    %cst_6 = arith.constant dense<0.000000e+00> : vector<2xf32>
    %10 = vector.multi_reduction <add>, %9, %cst_6 [1] : vector<2x32xf32> to vector<2xf32>
    %11 = vector.shape_cast %10 : vector<2xf32> to vector<2x1xf32>
    %cst_7 = arith.constant 3.200000e+01 : f32
    %12 = vector.broadcast %cst_7 : f32 to vector<2x1xf32>
    %13 = arith.divf %11, %12 : vector<2x1xf32>
    %cst_8 = arith.constant 9.99999974E-6 : f32
    %14 = vector.broadcast %cst_8 : f32 to vector<2x1xf32>
    %15 = arith.addf %13, %14 : vector<2x1xf32>
    %16 = math.rsqrt %15 : vector<2x1xf32>
    %17 = vector.broadcast %16 : vector<2x1xf32> to vector<2x32xf32>
    %18 = arith.mulf %8, %17 : vector<2x32xf32>
    %19 = vector.broadcast %1 : vector<1x32xf32> to vector<2x32xf32>
    %20 = arith.mulf %18, %19 : vector<2x32xf32>
    %21 = vector.broadcast %2 : vector<1x32xf32> to vector<2x32xf32>
    %22 = arith.addf %20, %21 : vector<2x32xf32>
    %23 = arith.truncf %22 : vector<2x32xf32> to vector<2x32xbf16>
    %c0_9 = arith.constant 0 : index
    %c0_10 = arith.constant 0 : index
    %24 = vector.load %arg4[%c0_9, %c0_10] : memref<32x128xbf16, #tpu.memory_space<vmem>>, vector<32x128xbf16>
    %cst_11 = arith.constant dense<0.000000e+00> : vector<2x128xf32>
    %25 = tpu.matmul %23, %24, %cst_11 {dimension_numbers = #tpu.dot_dimension_numbers<[1], [0], [0], [1], [0, 0, 1, 1], [], []>} : vector<2x32xbf16>, vector<32x128xbf16>, vector<2x128xf32> -> vector<2x128xf32>
    %c0_12 = arith.constant 0 : index
    %c0_13 = arith.constant 0 : index
    %26 = vector.load %arg5[%c0_12, %c0_13] : memref<1x128xf32, #tpu.memory_space<vmem>>, vector<1x128xf32>
    %27 = vector.broadcast %26 : vector<1x128xf32> to vector<2x128xf32>
    %28 = arith.addf %25, %27 : vector<2x128xf32>
    %c0_14 = arith.constant 0 : index
    %c0_15 = arith.constant 0 : index
    %29 = vector.load %arg6[%c0_14, %c0_15] : memref<2x128xf32, #tpu.memory_space<vmem>>, vector<2x128xf32>
    tpu.vector_store %arg6[%c0_14, %c0_15], %28 {strides = array<i32>} : memref<2x128xf32, #tpu.memory_space<vmem>>, vector<2x128xf32>,
    return
  }
  func.func @transform_0(%arg0: i32) -> (i32, i32) {
    %c0_i32 = arith.constant 0 : i32
    %c0_i32_0 = arith.constant 0 : i32
    %c0_i32_1 = arith.constant 0 : i32
    return %c0_i32, %c0_i32_0 : i32, i32
  }
  func.func @transform_1(%arg0: i32) -> (i32, i32) {
    %c0_i32 = arith.constant 0 : i32
    %c0_i32_0 = arith.constant 0 : i32
    %c0_i32_1 = arith.constant 0 : i32
    return %c0_i32, %c0_i32_0 : i32, i32
  }
  func.func @transform_2(%arg0: i32) -> (i32, i32) {
    %c0_i32 = arith.constant 0 : i32
    %c0_i32_0 = arith.constant 0 : i32
    %c0_i32_1 = arith.constant 0 : i32
    return %c0_i32, %c0_i32_0 : i32, i32
  }
  func.func @transform_3(%arg0: i32) -> (i32, i32) {
    %c0_i32 = arith.constant 0 : i32
    %c0_i32_0 = arith.constant 0 : i32
    %c0_i32_1 = arith.constant 0 : i32
    return %c0_i32, %c0_i32_0 : i32, i32
  }
  func.func @transform_4(%arg0: i32) -> (i32, i32) {
    %c0_i32 = arith.constant 0 : i32
    %c0_i32_0 = arith.constant 0 : i32
    %c0_i32_1 = arith.constant 0 : i32
    return %c0_i32, %c0_i32_0 : i32, i32
  }
  func.func @transform_5(%arg0: i32) -> (i32, i32) {
    %c0_i32 = arith.constant 0 : i32
    %c0_i32_0 = arith.constant 0 : i32
    %c0_i32_1 = arith.constant 0 : i32
    return %c0_i32, %c0_i32_0 : i32, i32
  }
}

</mosaic_0001>

<llo_original>
// kernel: deit_forward.7
$region0: #{deit_forward.7}
  #allocation0 [shape = 'u32[]', space=smem, size = 0x4, offset = 0x4, fixed_abs, tag = 'smem constant byte address 0x4 - core index']
  #allocation1 [shape = 'u32[144,128]{1,0:T(1,128)}', space=vmem, size = 0x12000, scoped, tag = 'internal scratch']
  %s0 = inlined_call_operand.vmem [shape: f32[2,32], index: 0, kind: input, shape index: {}]
  %s1 = inlined_call_operand.vmem [shape: f32[1,32], index: 1, kind: input, shape index: {}]
  %s2 = inlined_call_operand.vmem [shape: f32[1,32], index: 2, kind: input, shape index: {}]
  %s3 = inlined_call_operand.vmem [shape: bf16[32,128], index: 3, kind: input, shape index: {}]
  %s4 = inlined_call_operand.vmem [shape: f32[1,128], index: 4, kind: input, shape index: {}]
  %s5 = inlined_call_operand.hbm [shape: f32[2,128], index: 5, kind: output, shape index: {}]
  %s6 = sld [smem:[#allocation0]]
  $region30: #{deit_forward.7} parent=0
    _
  %s8 = ssub.s32 1, %s6
  %s9 = scalar_select 0, %s8, %s6
  $region1: #{deit_forward.7} parent=0
    #allocation2 [shape = 'u8[1024]{0}', space=vmem, size = 0x400, scoped, tag = 'output window, operand 0, single buffered']
    #allocation3 [shape = 's32[1]{0}', space=sflag, size = 0x4, scoped, tag = 'scoped memory for deit_forward.7']
    %10 = vsyncpa [#allocation3], 0
    // Predicated region
    $region2: #{deit_forward.7} parent=1 // pred_check
      _
    $region3: #{deit_forward.7} parent=1 // pred_check_branch
      %12 = sbr.rel (0) target = $region5
    $region4: #{deit_forward.7} parent=1 // pred_region
      _
    $region5: #{deit_forward.7} parent=1 // pred_fallthru
      _
    // Predicated region
    $region6: #{deit_forward.7} parent=1 // pred_check
      _
    $region7: #{deit_forward.7} parent=1 // pred_check_branch
      %14 = sbr.rel (0) target = $region9
    $region8: #{deit_forward.7} parent=1 // pred_region
      _
    $region9: #{deit_forward.7} parent=1 // pred_fallthru
      _
    // Predicated region
    $region10: #{deit_forward.7} parent=1 // pred_check
      _
    $region11: #{deit_forward.7} parent=1 // pred_check_branch
      %16 = sbr.rel (0) target = $region13
    $region12: #{deit_forward.7} parent=1 // pred_region
      _
    $region13: #{deit_forward.7} parent=1 // pred_fallthru
      _
    // Predicated region
    $region14: #{deit_forward.7} parent=1 // pred_check
      _
    $region15: #{deit_forward.7} parent=1 // pred_check_branch
      %18 = sbr.rel (0) target = $region17
    $region16: #{deit_forward.7} parent=1 // pred_region
      _
    $region17: #{deit_forward.7} parent=1 // pred_fallthru
      _
    // Predicated region
    $region18: #{deit_forward.7} parent=1 // pred_check
      _
    $region19: #{deit_forward.7} parent=1 // pred_check_branch
      %20 = sbr.rel (0) target = $region21
    $region20: #{deit_forward.7} parent=1 // pred_region
      _
    $region21: #{deit_forward.7} parent=1 // pred_fallthru
      _
    %v22 = vld [vmem:[%s0] sm:$0x3]
    %v23 = vld [vmem:[%s1] sm:$0x1]
    %v24 = vld [vmem:[%s2] sm:$0x1]
    %vm25 = vcmask 254976
    %v26 = vsel %vm25, %v22, 0.0
    %27 = vadd.xlane.f32.xlu0 %v26
    %v28 = vpop.xlane.xlu0 %27
    %v29 = vrcp.pop 32.0
    %v30 = vmul.f32 %v28, %v29
    %v31 = vsub.f32 %v22, %v30
    %v32 = vmul.f32 %v31, %v31
    %v33 = vsel %vm25, %v32, 0.0
    %34 = vadd.xlane.f32.xlu0 %v33
    %v35 = vpop.xlane.xlu0 %34
    %v36 = vmul.f32 %v35, %v29
    %v37 = vadd.f32 %v36, 1e-05
    %v38 = vrsqrt.pop %v37
    %v39 = vmul.f32 %v31, %v38
    %v41 = vlaneseq
    %v42 = vshrl.u32 %v41, 7
    %v43 = vsub.s32 0, %v42
    %v44 = vrot.slane %v23, %v43
    %v46 = vmul.f32 %v39, %v44
    %v48 = vlaneseq
    %v49 = vshrl.u32 %v48, 7
    %v50 = vsub.s32 0, %v49
    %v51 = vrot.slane %v24, %v50
    %v53 = vadd.f32 %v46, %v51
    %v54 = vpack.c.bf16 %v53, %v53
    %v55 = vld [vmem:[%s3] sm:$0xf]
    %v56 = vld [vmem:[%s3 + $0x4] sm:$0xf]
    %v57 = vld [vmem:[%s3 + $0x8] sm:$0xf]
    %v58 = vld [vmem:[%s3 + $0xc] sm:$0xf]
    %v59 = vld [vmem:[%s4] sm:$0x1]
    %v61 = vlaneseq
    %v62 = vshrl.u32 %v61, 7
    %v63 = vsub.s32 0, %v62
    %v64 = vrot.slane %v59, %v63
    %v70 = vunpack.c.l.b16 %v55
    %v71 = vunpack.c.l.b16 %v56
    %v72 = vunpack.c.l.b16 %v57
    %v73 = vunpack.c.l.b16 %v58
    %v74 = vpack.c.b16 %v71, %v70
    %v75 = vpack.c.b16 %v73, %v72
    %vm78 = vcmask 261120
    %v80 = vsel %vm78, %v54, 0
    %82 = vmatprep.subr.bf16.mxu0 0
    %83 = vmatpush1.bf16.msra.mxu0 %v74
    %84 = vmatprep.subr.bf16.mxu0 0
    %85 = vmatpush1.bf16.msra.mxu0 %v75
    %86 = vmatprep.subr.bf16.mxu0 0
    %87 = vmatpush1.bf16.msra.mxu0 0
    %88 = vmatprep.subr.bf16.mxu0 0
    %89 = vmatpush1.bf16.msra.mxu0 0
    %90 = vmatprep.subr.bf16.mxu0 0
    %91 = vmatpush1.bf16.msra.mxu0 0
    %92 = vmatprep.subr.bf16.mxu0 0
    %93 = vmatpush1.bf16.msra.mxu0 0
    %94 = vmatprep.subr.bf16.mxu0 0
    %95 = vmatpush1.bf16.msra.mxu0 0
    %96 = vmatprep.subr.bf16.mxu0 0
    %97 = vmatpush1.bf16.msra.mxu0 0
    %98 = vmatprep.subr.bf16.mxu0 0
    %99 = vmatpush1.bf16.msra.mxu0 0
    %100 = vmatprep.subr.bf16.mxu0 0
    %101 = vmatpush1.bf16.msra.mxu0 0
    %102 = vmatprep.subr.bf16.mxu0 0
    %103 = vmatpush1.bf16.msra.mxu0 0
    %104 = vmatprep.subr.bf16.mxu0 0
    %105 = vmatpush1.bf16.msra.mxu0 0
    %106 = vmatprep.subr.bf16.mxu0 0
    %107 = vmatpush1.bf16.msra.mxu0 0
    %108 = vmatprep.subr.bf16.mxu0 0
    %109 = vmatpush1.bf16.msra.mxu0 0
    %110 = vmatprep.subr.bf16.mxu0 0
    %111 = vmatpush1.bf16.msra.mxu0 0
    %112 = vmatprep.subr.bf16.mxu0 0
    %113 = vmatpush1.bf16.msra.mxu0 0
    %114 = vmatprep.mubr.bf16.mxu0 0
    %115 = vmatmul.mubr.bf16.gmra.mrb[0].mxu0 %v80
    %v116 = vpop.f32.mrb[0].mxu0
    %v117 = vadd.f32 %v64, %v116
    %v118 = vpop.f32.mrb[0].mxu0
    %v119 = vpop.f32.mrb[0].mxu0
    %v120 = vpop.f32.mrb[0].mxu0
    %121 = vdwg.mxu0
    %122 = vst [vmem:[#allocation2] sm:$0x3] %v117
    // Predicated region
    $region22: #{deit_forward.7} parent=1 // pred_check
      _
    $region23: #{deit_forward.7} parent=1 // pred_check_branch
      %124 = sbr.rel (0) target = $region25
    $region24: #{deit_forward.7} parent=1 // pred_region
      %s126 = ssub.s32 32, 32
      %127 = vsyncadd [#allocation3], %s126
      %s129 = sshll.u32 [#allocation2], 4
      %s130 = int_to_ptr.vmem [resolvable:$true] %s129
      %132 = dma.vmem_to_hbm [thread:$0]  %s130, 32, %s5, [#allocation3]
    $region25: #{deit_forward.7} parent=1 // pred_fallthru
      _
    // Predicated region
    $region26: #{deit_forward.7} parent=1 // pred_check
      _
    $region27: #{deit_forward.7} parent=1 // pred_check_branch
      %134 = sbr.rel (0) target = $region29
    $region28: #{deit_forward.7} parent=1 // pred_region
      %135 = dma.done [#allocation3], 32
    $region29: #{deit_forward.7} parent=1 // pred_fallthru
      _
    %136 = vsyncpa [#allocation3], 1

// kernel: deit_forward.4
$region0: #{deit_forward.4}
  #allocation0 [shape = 'u32[]', space=smem, size = 0x4, offset = 0x4, fixed_abs, tag = 'smem constant byte address 0x4 - core index']
  #allocation1 [shape = 'u32[144,128]{1,0:T(1,128)}', space=vmem, size = 0x12000, scoped, tag = 'internal scratch']
  %s0 = inlined_call_operand.vmem [shape: f32[8,192], index: 0, kind: input, shape index: {}]
  %s1 = inlined_call_operand.vmem [shape: bf16[192,32], index: 1, kind: input, shape index: {}]
  %s2 = inlined_call_operand.vmem [shape: f32[1,32], index: 2, kind: input, shape index: {}]
  %s3 = inlined_call_operand.vmem [shape: f32[8,32], index: 3, kind: output, shape index: {}]
  %s4 = sld [smem:[#allocation0]]
  $region22: #{deit_forward.4} parent=0
    _
  %s6 = ssub.s32 1, %s4
  %s7 = scalar_select 0, %s6, %s4
  // Predicated region
  $region2: #{deit_forward.4} parent=0 // pred_check
    _
  $region3: #{deit_forward.4} parent=0 // pred_check_branch
    %9 = sbr.rel (0) target = $region5
  $region4: #{deit_forward.4} parent=0 // pred_region
    _
  $region5: #{deit_forward.4} parent=0 // pred_fallthru
    _
  // Predicated region
  $region6: #{deit_forward.4} parent=0 // pred_check
    _
  $region7: #{deit_forward.4} parent=0 // pred_check_branch
    %11 = sbr.rel (0) target = $region9
  $region8: #{deit_forward.4} parent=0 // pred_region
    _
  $region9: #{deit_forward.4} parent=0 // pred_fallthru
    _
  // Predicated region
  $region10: #{deit_forward.4} parent=0 // pred_check
    _
  $region11: #{deit_forward.4} parent=0 // pred_check_branch
    %13 = sbr.rel (0) target = $region13
  $region12: #{deit_forward.4} parent=0 // pred_region
    _
  $region13: #{deit_forward.4} parent=0 // pred_fallthru
    _
  %v15 = vld [vmem:[%s0] sm:$0xff]
  %v16 = vld [vmem:[%s0 + $0x8] sm:$0xff]
  %v17 = vpack.c.bf16 %v15, %v15
  %v18 = vpack.c.bf16 %v16, %v16
  %v19 = vld [vmem:[%s1] sm:$0xf]
  %v20 = vld [vmem:[%s1 + $0x4] sm:$0xf]
  %v21 = vld [vmem:[%s1 + $0x8] sm:$0xf]
  %v22 = vld [vmem:[%s1 + $0xc] sm:$0xf]
  %v23 = vld [vmem:[%s1 + $0x10] sm:$0xf]
  %v24 = vld [vmem:[%s1 + $0x14] sm:$0xf]
  %v25 = vld [vmem:[%s1 + $0x18] sm:$0xf]
  %v26 = vld [vmem:[%s1 + $0x1c] sm:$0xf]
  %v27 = vld [vmem:[%s1 + $0x20] sm:$0xf]
  %v28 = vld [vmem:[%s1 + $0x24] sm:$0xf]
  %v29 = vld [vmem:[%s1 + $0x28] sm:$0xf]
  %v30 = vld [vmem:[%s1 + $0x2c] sm:$0xf]
  %v31 = vld [vmem:[%s1 + $0x30] sm:$0xf]
  %v32 = vld [vmem:[%s1 + $0x34] sm:$0xf]
  %v33 = vld [vmem:[%s1 + $0x38] sm:$0xf]
  %v34 = vld [vmem:[%s1 + $0x3c] sm:$0xf]
  %v35 = vld [vmem:[%s1 + $0x40] sm:$0xf]
  %v36 = vld [vmem:[%s1 + $0x44] sm:$0xf]
  %v37 = vld [vmem:[%s1 + $0x48] sm:$0xf]
  %v38 = vld [vmem:[%s1 + $0x4c] sm:$0xf]
  %v39 = vld [vmem:[%s1 + $0x50] sm:$0xf]
  %v40 = vld [vmem:[%s1 + $0x54] sm:$0xf]
  %v41 = vld [vmem:[%s1 + $0x58] sm:$0xf]
  %v42 = vld [vmem:[%s1 + $0x5c] sm:$0xf]
  %v43 = vld [vmem:[%s2] sm:$0x1]
  %v45 = vlaneseq
  %v46 = vshrl.u32 %v45, 7
  %v47 = vsub.s32 0, %v46
  %v48 = vrot.slane %v43, %v47
  %v74 = vunpack.c.l.b16 %v19
  %v75 = vunpack.c.l.b16 %v20
  %v76 = vunpack.c.l.b16 %v21
  %v77 = vunpack.c.l.b16 %v22
  %v78 = vunpack.c.l.b16 %v23
  %v79 = vunpack.c.l.b16 %v24
  %v80 = vunpack.c.l.b16 %v25
  %v81 = vunpack.c.l.b16 %v26
  %v82 = vunpack.c.l.b16 %v27
  %v83 = vunpack.c.l.b16 %v28
  %v84 = vunpack.c.l.b16 %v29
  %v85 = vunpack.c.l.b16 %v30
  %v86 = vunpack.c.l.b16 %v31
  %v87 = vunpack.c.l.b16 %v32
  %v88 = vunpack.c.l.b16 %v33
  %v89 = vunpack.c.l.b16 %v34
  %v90 = vunpack.c.l.b16 %v35
  %v91 = vunpack.c.l.b16 %v36
  %v92 = vunpack.c.l.b16 %v37
  %v93 = vunpack.c.l.b16 %v38
  %v94 = vunpack.c.l.b16 %v39
  %v95 = vunpack.c.l.b16 %v40
  %v96 = vunpack.c.l.b16 %v41
  %v97 = vunpack.c.l.b16 %v42
  %v98 = vpack.c.b16 %v75, %v74
  %v99 = vpack.c.b16 %v77, %v76
  %v100 = vpack.c.b16 %v79, %v78
  %v101 = vpack.c.b16 %v81, %v80
  %v102 = vpack.c.b16 %v83, %v82
  %v103 = vpack.c.b16 %v85, %v84
  %v104 = vpack.c.b16 %v87, %v86
  %v105 = vpack.c.b16 %v89, %v88
  %v106 = vpack.c.b16 %v91, %v90
  %v107 = vpack.c.b16 %v93, %v92
  %v108 = vpack.c.b16 %v95, %v94
  %v109 = vpack.c.b16 %v97, %v96
  %vm122 = vcmask 523264
  %v124 = vsel %vm122, %v18, 0
  %126 = vmatprep.subr.bf16.mxu0 0
  %127 = vmatpush1.bf16.msra.mxu0 %v98
  %128 = vmatprep.subr.bf16.mxu0 0
  %129 = vmatpush1.bf16.msra.mxu0 %v99
  %130 = vmatprep.subr.bf16.mxu0 0
  %131 = vmatpush1.bf16.msra.mxu0 %v100
  %132 = vmatprep.subr.bf16.mxu0 0
  %133 = vmatpush1.bf16.msra.mxu0 %v101
  %134 = vmatprep.subr.bf16.mxu0 0
  %135 = vmatpush1.bf16.msra.mxu0 %v102
  %136 = vmatprep.subr.bf16.mxu0 0
  %137 = vmatpush1.bf16.msra.mxu0 %v103
  %138 = vmatprep.subr.bf16.mxu0 0
  %139 = vmatpush1.bf16.msra.mxu0 %v104
  %140 = vmatprep.subr.bf16.mxu0 0
  %141 = vmatpush1.bf16.msra.mxu0 %v105
  %142 = vmatprep.subr.bf16.mxu0 0
  %143 = vmatpush1.bf16.msra.mxu0 %v106
  %144 = vmatprep.subr.bf16.mxu0 0
  %145 = vmatpush1.bf16.msra.mxu0 %v107
  %146 = vmatprep.subr.bf16.mxu0 0
  %147 = vmatpush1.bf16.msra.mxu0 %v108
  %148 = vmatprep.subr.bf16.mxu0 0
  %149 = vmatpush1.bf16.msra.mxu0 %v109
  %150 = vmatprep.subr.bf16.mxu0 0
  %151 = vmatpush1.bf16.msra.mxu0 0
  %152 = vmatprep.subr.bf16.mxu0 0
  %153 = vmatpush1.bf16.msra.mxu0 0
  %154 = vmatprep.subr.bf16.mxu0 0
  %155 = vmatpush1.bf16.msra.mxu0 0
  %156 = vmatprep.subr.bf16.mxu0 0
  %157 = vmatpush1.bf16.msra.mxu0 0
  %158 = vmatprep.mubr.bf16.mxu0 %v124
  %159 = vmatmul.mubr.bf16.gmra.mrb[0].mxu0 %v17
  %v160 = vpop.f32.mrb[0].mxu0
  %v161 = vadd.f32 %v48, %v160
  %v162 = vpop.f32.mrb[0].mxu0
  %v163 = vpop.f32.mrb[0].mxu0
  %v164 = vpop.f32.mrb[0].mxu0
  %165 = vdwg.mxu0
  %vm166 = vcmask 261120
  %167 = vst.msk [vmem:[%s3] sm:$0xff] %vm166, %v161
  // Predicated region
  $region14: #{deit_forward.4} parent=0 // pred_check
    _
  $region15: #{deit_forward.4} parent=0 // pred_check_branch
    %169 = sbr.rel (0) target = $region17
  $region16: #{deit_forward.4} parent=0 // pred_region
    _
  $region17: #{deit_forward.4} parent=0 // pred_fallthru
    _
  // Predicated region
  $region18: #{deit_forward.4} parent=0 // pred_check
    _
  $region19: #{deit_forward.4} parent=0 // pred_check_branch
    %171 = sbr.rel (0) target = $region21
  $region20: #{deit_forward.4} parent=0 // pred_region
    _
  $region21: #{deit_forward.4} parent=0 // pred_fallthru
    _

// kernel: deit_forward.5
$region0: #{deit_forward.5}
  #allocation0 [shape = 'u32[]', space=smem, size = 0x4, offset = 0x4, fixed_abs, tag = 'smem constant byte address 0x4 - core index']
  #allocation1 [shape = 'u32[144,128]{1,0:T(1,128)}', space=vmem, size = 0x12000, scoped, tag = 'internal scratch']
  %s0 = inlined_call_operand.vmem [shape: f32[2,16,32], index: 0, kind: input, shape index: {}]
  %s1 = inlined_call_operand.vmem [shape: f32[1,32], index: 1, kind: input, shape index: {}]
  %s2 = inlined_call_operand.vmem [shape: f32[1,32], index: 2, kind: input, shape index: {}]
  %s3 = inlined_call_operand.vmem [shape: bf16[32,96], index: 3, kind: input, shape index: {}]
  %s4 = inlined_call_operand.vmem [shape: f32[1,96], index: 4, kind: input, shape index: {}]
  %s5 = inlined_call_operand.vmem [shape: bf16[32,32], index: 5, kind: input, shape index: {}]
  %s6 = inlined_call_operand.vmem [shape: f32[1,32], index: 6, kind: input, shape index: {}]
  %s7 = inlined_call_operand.vmem [shape: f32[1,32], index: 7, kind: input, shape index: {}]
  %s8 = inlined_call_operand.vmem [shape: f32[1,32], index: 8, kind: input, shape index: {}]
  %s9 = inlined_call_operand.vmem [shape: bf16[32,128], index: 9, kind: input, shape index: {}]
  %s10 = inlined_call_operand.vmem [shape: f32[1,128], index: 10, kind: input, shape index: {}]
  %s11 = inlined_call_operand.vmem [shape: bf16[128,32], index: 11, kind: input, shape index: {}]
  %s12 = inlined_call_operand.vmem [shape: f32[1,32], index: 12, kind: input, shape index: {}]
  %s13 = inlined_call_operand.vmem [shape: f32[2,16,32], index: 13, kind: output, shape index: {}]
  %s14 = sld [smem:[#allocation0]]
  $region85: #{deit_forward.5} parent=0
    _
  %s16 = ssub.s32 1, %s14
  %s17 = scalar_select 0, %s16, %s14
  loop: start=0, step=1, limit=4
  $region2: #{deit_forward.5} parent=0 // loop_pre_header
    _
  $region3: #{deit_forward.5} parent=0 // loop_header
    %s19 = sphi 0, %s23
    %p20 = scmp.ge.s32.totalorder %s19, 4
    %s29 = sphi 0, %s31
    %s32 = sphi 0, %s29
    %s33 = sphi 0, %s32
    %s49 = sphi 0, %s33
    %s53 = sphi 0, %s53
    %s55 = sphi 0, %s53
    %s56 = sphi 0, %s55
    %s70 = sphi 0, %s56
    %s74 = sphi 0, %s74
    %s76 = sphi 0, %s74
    %s77 = sphi 0, %s76
    %s91 = sphi 0, %s77
    %s95 = sphi 0, %s95
    %s97 = sphi 0, %s95
    %s98 = sphi 0, %s97
    %s112 = sphi 0, %s98
    %s116 = sphi 0, %s116
    %s118 = sphi 0, %s116
    %s119 = sphi 0, %s118
    %s133 = sphi 0, %s119
    %s137 = sphi 0, %s137
    %s139 = sphi 0, %s137
    %s140 = sphi 0, %s139
    %s154 = sphi 0, %s140
    %s158 = sphi 0, %s158
    %s160 = sphi 0, %s158
    %s161 = sphi 0, %s160
    %s175 = sphi 0, %s161
    %s179 = sphi 0, %s179
    %s181 = sphi 0, %s179
    %s182 = sphi 0, %s181
    %s196 = sphi 0, %s182
    %s200 = sphi 0, %s200
    %s202 = sphi 0, %s200
    %s203 = sphi 0, %s202
    %s217 = sphi 0, %s203
    %s221 = sphi 0, %s221
    %s223 = sphi 0, %s221
    %s224 = sphi 0, %s223
    %s238 = sphi 0, %s224
    %s242 = sphi 0, %s242
    %s244 = sphi 0, %s242
    %s245 = sphi 0, %s244
    %s259 = sphi 0, %s245
    %s263 = sphi 0, %s263
    %s265 = sphi 0, %s263
    %s266 = sphi 0, %s265
    %s280 = sphi 0, %s266
    %s284 = sphi 0, %s284
    %s286 = sphi 0, %s284
    %s287 = sphi 0, %s286
    %s301 = sphi 0, %s287
    %s307 = sphi 0, %s309
    %s310 = sphi 0, %s307
    %s311 = sphi 0, %s310
    %s327 = sphi 0, %s311
  $region4: #{deit_forward.5} parent=0 // loop_header_branch
    %22 = sbr.rel (%p20) target = $region8
  $region5: #{deit_forward.5} parent=0 // loop_body
    %s24 = ssub.s32 %s19, 1
    %s25 = ssub.s32 %s19, 2
    %s26 = sadd.s32 %s19, 1
    %s27 = ssub.s32 %s19, %s26
    %p28 = scmp.eq.s32.totalorder %s27, 0
    %s30 = sadd.s32 %s29, 1
    %s31 = scalar_select %p28, %s29, %s30
    %p34 = pneg %p28
    %p35 = scmp.eq.s32.totalorder %s19, 1
    %p36 = por %p34, %p35
    %p37 = scmp.ne.s32.totalorder %s29, %s32
    %p38 = scmp.eq.s32.totalorder %s19, 0
    %p39 = por %p37, %p38
    %p40 = scmp.ne.s32.totalorder %s29, %s32
    %p41 = scmp.eq.s32.totalorder %s24, 1
    %p42 = por %p40, %p41
    %p43 = scmp.ne.s32.totalorder %s32, %s33
    %p44 = scmp.eq.s32.totalorder %s24, 0
    %p45 = por %p43, %p44
    %p46 = scmp.ne.s32.totalorder %s32, %s33
    %p47 = scmp.eq.s32.totalorder %s25, 1
    %p48 = por %p46, %p47
    %p50 = scmp.ne.s32.totalorder %s33, %s49
    %p51 = scmp.eq.s32.totalorder %s25, 0
    %p52 = por %p50, %p51
    %s54 = sadd.s32 %s53, 1
    %p57 = scmp.eq.s32.totalorder %s19, 1
    %p58 = scmp.ne.s32.totalorder %s53, %s55
    %p59 = scmp.eq.s32.totalorder %s19, 0
    %p60 = por %p58, %p59
    %p61 = scmp.ne.s32.totalorder %s53, %s55
    %p62 = scmp.eq.s32.totalorder %s24, 1
    %p63 = por %p61, %p62
    %p64 = scmp.ne.s32.totalorder %s55, %s56
    %p65 = scmp.eq.s32.totalorder %s24, 0
    %p66 = por %p64, %p65
    %p67 = scmp.ne.s32.totalorder %s55, %s56
    %p68 = scmp.eq.s32.totalorder %s25, 1
    %p69 = por %p67, %p68
    %p71 = scmp.ne.s32.totalorder %s56, %s70
    %p72 = scmp.eq.s32.totalorder %s25, 0
    %p73 = por %p71, %p72
    %s75 = sadd.s32 %s74, 1
    %p78 = scmp.eq.s32.totalorder %s19, 1
    %p79 = scmp.ne.s32.totalorder %s74, %s76
    %p80 = scmp.eq.s32.totalorder %s19, 0
    %p81 = por %p79, %p80
    %p82 = scmp.ne.s32.totalorder %s74, %s76
    %p83 = scmp.eq.s32.totalorder %s24, 1
    %p84 = por %p82, %p83
    %p85 = scmp.ne.s32.totalorder %s76, %s77
    %p86 = scmp.eq.s32.totalorder %s24, 0
    %p87 = por %p85, %p86
    %p88 = scmp.ne.s32.totalorder %s76, %s77
    %p89 = scmp.eq.s32.totalorder %s25, 1
    %p90 = por %p88, %p89
    %p92 = scmp.ne.s32.totalorder %s77, %s91
    %p93 = scmp.eq.s32.totalorder %s25, 0
    %p94 = por %p92, %p93
    %s96 = sadd.s32 %s95, 1
    %p99 = scmp.eq.s32.totalorder %s19, 1
    %p100 = scmp.ne.s32.totalorder %s95, %s97
    %p101 = scmp.eq.s32.totalorder %s19, 0
    %p102 = por %p100, %p101
    %p103 = scmp.ne.s32.totalorder %s95, %s97
    %p104 = scmp.eq.s32.totalorder %s24, 1
    %p105 = por %p103, %p104
    %p106 = scmp.ne.s32.totalorder %s97, %s98
    %p107 = scmp.eq.s32.totalorder %s24, 0
    %p108 = por %p106, %p107
    %p109 = scmp.ne.s32.totalorder %s97, %s98
    %p110 = scmp.eq.s32.totalorder %s25, 1
    %p111 = por %p109, %p110
    %p113 = scmp.ne.s32.totalorder %s98, %s112
    %p114 = scmp.eq.s32.totalorder %s25, 0
    %p115 = por %p113, %p114
    %s117 = sadd.s32 %s116, 1
    %p120 = scmp.eq.s32.totalorder %s19, 1
    %p121 = scmp.ne.s32.totalorder %s116, %s118
    %p122 = scmp.eq.s32.totalorder %s19, 0
    %p123 = por %p121, %p122
    %p124 = scmp.ne.s32.totalorder %s116, %s118
    %p125 = scmp.eq.s32.totalorder %s24, 1
    %p126 = por %p124, %p125
    %p127 = scmp.ne.s32.totalorder %s118, %s119
    %p128 = scmp.eq.s32.totalorder %s24, 0
    %p129 = por %p127, %p128
    %p130 = scmp.ne.s32.totalorder %s118, %s119
    %p131 = scmp.eq.s32.totalorder %s25, 1
    %p132 = por %p130, %p131
    %p134 = scmp.ne.s32.totalorder %s119, %s133
    %p135 = scmp.eq.s32.totalorder %s25, 0
    %p136 = por %p134, %p135
    %s138 = sadd.s32 %s137, 1
    %p141 = scmp.eq.s32.totalorder %s19, 1
    %p142 = scmp.ne.s32.totalorder %s137, %s139
    %p143 = scmp.eq.s32.totalorder %s19, 0
    %p144 = por %p142, %p143
    %p145 = scmp.ne.s32.totalorder %s137, %s139
    %p146 = scmp.eq.s32.totalorder %s24, 1
    %p147 = por %p145, %p146
    %p148 = scmp.ne.s32.totalorder %s139, %s140
    %p149 = scmp.eq.s32.totalorder %s24, 0
    %p150 = por %p148, %p149
    %p151 = scmp.ne.s32.totalorder %s139, %s140
    %p152 = scmp.eq.s32.totalorder %s25, 1
    %p153 = por %p151, %p152
    %p155 = scmp.ne.s32.totalorder %s140, %s154
    %p156 = scmp.eq.s32.totalorder %s25, 0
    %p157 = por %p155, %p156
    %s159 = sadd.s32 %s158, 1
    %p162 = scmp.eq.s32.totalorder %s19, 1
    %p163 = scmp.ne.s32.totalorder %s158, %s160
    %p164 = scmp.eq.s32.totalorder %s19, 0
    %p165 = por %p163, %p164
    %p166 = scmp.ne.s32.totalorder %s158, %s160
    %p167 = scmp.eq.s32.totalorder %s24, 1
    %p168 = por %p166, %p167
    %p169 = scmp.ne.s32.totalorder %s160, %s161
    %p170 = scmp.eq.s32.totalorder %s24, 0
    %p171 = por %p169, %p170
    %p172 = scmp.ne.s32.totalorder %s160, %s161
    %p173 = scmp.eq.s32.totalorder %s25, 1
    %p174 = por %p172, %p173
    %p176 = scmp.ne.s32.totalorder %s161, %s175
    %p177 = scmp.eq.s32.totalorder %s25, 0
    %p178 = por %p176, %p177
    %s180 = sadd.s32 %s179, 1
    %p183 = scmp.eq.s32.totalorder %s19, 1
    %p184 = scmp.ne.s32.totalorder %s179, %s181
    %p185 = scmp.eq.s32.totalorder %s19, 0
    %p186 = por %p184, %p185
    %p187 = scmp.ne.s32.totalorder %s179, %s181
    %p188 = scmp.eq.s32.totalorder %s24, 1
    %p189 = por %p187, %p188
    %p190 = scmp.ne.s32.totalorder %s181, %s182
    %p191 = scmp.eq.s32.totalorder %s24, 0
    %p192 = por %p190, %p191
    %p193 = scmp.ne.s32.totalorder %s181, %s182
    %p194 = scmp.eq.s32.totalorder %s25, 1
    %p195 = por %p193, %p194
    %p197 = scmp.ne.s32.totalorder %s182, %s196
    %p198 = scmp.eq.s32.totalorder %s25, 0
    %p199 = por %p197, %p198
    %s201 = sadd.s32 %s200, 1
    %p204 = scmp.eq.s32.totalorder %s19, 1
    %p205 = scmp.ne.s32.totalorder %s200, %s202
    %p206 = scmp.eq.s32.totalorder %s19, 0
    %p207 = por %p205, %p206
    %p208 = scmp.ne.s32.totalorder %s200, %s202
    %p209 = scmp.eq.s32.totalorder %s24, 1
    %p210 = por %p208, %p209
    %p211 = scmp.ne.s32.totalorder %s202, %s203
    %p212 = scmp.eq.s32.totalorder %s24, 0
    %p213 = por %p211, %p212
    %p214 = scmp.ne.s32.totalorder %s202, %s203
    %p215 = scmp.eq.s32.totalorder %s25, 1
    %p216 = por %p214, %p215
    %p218 = scmp.ne.s32.totalorder %s203, %s217
    %p219 = scmp.eq.s32.totalorder %s25, 0
    %p220 = por %p218, %p219
    %s222 = sadd.s32 %s221, 1
    %p225 = scmp.eq.s32.totalorder %s19, 1
    %p226 = scmp.ne.s32.totalorder %s221, %s223
    %p227 = scmp.eq.s32.totalorder %s19, 0
    %p228 = por %p226, %p227
    %p229 = scmp.ne.s32.totalorder %s221, %s223
    %p230 = scmp.eq.s32.totalorder %s24, 1
    %p231 = por %p229, %p230
    %p232 = scmp.ne.s32.totalorder %s223, %s224
    %p233 = scmp.eq.s32.totalorder %s24, 0
    %p234 = por %p232, %p233
    %p235 = scmp.ne.s32.totalorder %s223, %s224
    %p236 = scmp.eq.s32.totalorder %s25, 1
    %p237 = por %p235, %p236
    %p239 = scmp.ne.s32.totalorder %s224, %s238
    %p240 = scmp.eq.s32.totalorder %s25, 0
    %p241 = por %p239, %p240
    %s243 = sadd.s32 %s242, 1
    %p246 = scmp.eq.s32.totalorder %s19, 1
    %p247 = scmp.ne.s32.totalorder %s242, %s244
    %p248 = scmp.eq.s32.totalorder %s19, 0
    %p249 = por %p247, %p248
    %p250 = scmp.ne.s32.totalorder %s242, %s244
    %p251 = scmp.eq.s32.totalorder %s24, 1
    %p252 = por %p250, %p251
    %p253 = scmp.ne.s32.totalorder %s244, %s245
    %p254 = scmp.eq.s32.totalorder %s24, 0
    %p255 = por %p253, %p254
    %p256 = scmp.ne.s32.totalorder %s244, %s245
    %p257 = scmp.eq.s32.totalorder %s25, 1
    %p258 = por %p256, %p257
    %p260 = scmp.ne.s32.totalorder %s245, %s259
    %p261 = scmp.eq.s32.totalorder %s25, 0
    %p262 = por %p260, %p261
    %s264 = sadd.s32 %s263, 1
    %p267 = scmp.eq.s32.totalorder %s19, 1
    %p268 = scmp.ne.s32.totalorder %s263, %s265
    %p269 = scmp.eq.s32.totalorder %s19, 0
    %p270 = por %p268, %p269
    %p271 = scmp.ne.s32.totalorder %s263, %s265
    %p272 = scmp.eq.s32.totalorder %s24, 1
    %p273 = por %p271, %p272
    %p274 = scmp.ne.s32.totalorder %s265, %s266
    %p275 = scmp.eq.s32.totalorder %s24, 0
    %p276 = por %p274, %p275
    %p277 = scmp.ne.s32.totalorder %s265, %s266
    %p278 = scmp.eq.s32.totalorder %s25, 1
    %p279 = por %p277, %p278
    %p281 = scmp.ne.s32.totalorder %s266, %s280
    %p282 = scmp.eq.s32.totalorder %s25, 0
    %p283 = por %p281, %p282
    %s285 = sadd.s32 %s284, 1
    %p288 = scmp.eq.s32.totalorder %s19, 1
    %p289 = scmp.ne.s32.totalorder %s284, %s286
    %p290 = scmp.eq.s32.totalorder %s19, 0
    %p291 = por %p289, %p290
    %p292 = scmp.ne.s32.totalorder %s284, %s286
    %p293 = scmp.eq.s32.totalorder %s24, 1
    %p294 = por %p292, %p293
    %p295 = scmp.ne.s32.totalorder %s286, %s287
    %p296 = scmp.eq.s32.totalorder %s24, 0
    %p297 = por %p295, %p296
    %p298 = scmp.ne.s32.totalorder %s286, %s287
    %p299 = scmp.eq.s32.totalorder %s25, 1
    %p300 = por %p298, %p299
    %p302 = scmp.ne.s32.totalorder %s287, %s301
    %p303 = scmp.eq.s32.totalorder %s25, 0
    %p304 = por %p302, %p303
    %s305 = ssub.s32 %s19, %s26
    %p306 = scmp.eq.s32.totalorder %s305, 0
    %s308 = sadd.s32 %s307, 1
    %s309 = scalar_select %p306, %s307, %s308
    %p312 = pneg %p306
    %p313 = scmp.eq.s32.totalorder %s19, 1
    %p314 = por %p312, %p313
    %p315 = scmp.ne.s32.totalorder %s307, %s310
    %p316 = scmp.eq.s32.totalorder %s19, 0
    %p317 = por %p315, %p316
    %p318 = scmp.ne.s32.totalorder %s307, %s310
    %p319 = scmp.eq.s32.totalorder %s24, 1
    %p320 = por %p318, %p319
    %p321 = scmp.ne.s32.totalorder %s310, %s311
    %p322 = scmp.eq.s32.totalorder %s24, 0
    %p323 = por %p321, %p322
    %p324 = scmp.ne.s32.totalorder %s310, %s311
    %p325 = scmp.eq.s32.totalorder %s25, 1
    %p326 = por %p324, %p325
    %p328 = scmp.ne.s32.totalorder %s311, %s327
    %p329 = scmp.eq.s32.totalorder %s25, 0
    %p330 = por %p328, %p329
    %p331 = scmp.le.s32.totalorder 1, %s19
    %p332 = scmp.lt.s32.totalorder %s19, 3
    %p333 = pnand %p331, %p332
    %p334 = pneg %p333
    // Predicated region
    $region9: #{deit_forward.5} parent=5 // pred_check
      _
    $region10: #{deit_forward.5} parent=5 // pred_check_branch
      %336 = sbr.rel (%p333) target = $region12
    $region11: #{deit_forward.5} parent=5 // pred_region
      %s337 = ssub.s32 %s19, 1
      // Predicated region
      $region13: #{deit_forward.5} parent=11 // pred_check
        %p338 = pneg %p66
      $region14: #{deit_forward.5} parent=11 // pred_check_branch
        %340 = sbr.rel (%p338) target = $region16
      $region15: #{deit_forward.5} parent=11 // pred_region
        _
      $region16: #{deit_forward.5} parent=11 // pred_fallthru
        _
      // Predicated region
      $region17: #{deit_forward.5} parent=11 // pred_check
        %p341 = pneg %p87
      $region18: #{deit_forward.5} parent=11 // pred_check_branch
        %343 = sbr.rel (%p341) target = $region20
      $region19: #{deit_forward.5} parent=11 // pred_region
        _
      $region20: #{deit_forward.5} parent=11 // pred_fallthru
        _
      // Predicated region
      $region21: #{deit_forward.5} parent=11 // pred_check
        %p344 = pneg %p108
      $region22: #{deit_forward.5} parent=11 // pred_check_branch
        %346 = sbr.rel (%p344) target = $region24
      $region23: #{deit_forward.5} parent=11 // pred_region
        _
      $region24: #{deit_forward.5} parent=11 // pred_fallthru
        _
      // Predicated region
      $region25: #{deit_forward.5} parent=11 // pred_check
        %p347 = pneg %p129
      $region26: #{deit_forward.5} parent=11 // pred_check_branch
        %349 = sbr.rel (%p347) target = $region28
      $region27: #{deit_forward.5} parent=11 // pred_region
        _
      $region28: #{deit_forward.5} parent=11 // pred_fallthru
        _
      // Predicated region
      $region29: #{deit_forward.5} parent=11 // pred_check
        %p350 = pneg %p150
      $region30: #{deit_forward.5} parent=11 // pred_check_branch
        %352 = sbr.rel (%p350) target = $region32
      $region31: #{deit_forward.5} parent=11 // pred_region
        _
      $region32: #{deit_forward.5} parent=11 // pred_fallthru
        _
      // Predicated region
      $region33: #{deit_forward.5} parent=11 // pred_check
        %p353 = pneg %p171
      $region34: #{deit_forward.5} parent=11 // pred_check_branch
        %355 = sbr.rel (%p353) target = $region36
      $region35: #{deit_forward.5} parent=11 // pred_region
        _
      $region36: #{deit_forward.5} parent=11 // pred_fallthru
        _
      // Predicated region
      $region37: #{deit_forward.5} parent=11 // pred_check
        %p356 = pneg %p192
      $region38: #{deit_forward.5} parent=11 // pred_check_branch
        %358 = sbr.rel (%p356) target = $region40
      $region39: #{deit_forward.5} parent=11 // pred_region
        _
      $region40: #{deit_forward.5} parent=11 // pred_fallthru
        _
      // Predicated region
      $region41: #{deit_forward.5} parent=11 // pred_check
        %p359 = pneg %p213
      $region42: #{deit_forward.5} parent=11 // pred_check_branch
        %361 = sbr.rel (%p359) target = $region44
      $region43: #{deit_forward.5} parent=11 // pred_region
        _
      $region44: #{deit_forward.5} parent=11 // pred_fallthru
        _
      // Predicated region
      $region45: #{deit_forward.5} parent=11 // pred_check
        %p362 = pneg %p234
      $region46: #{deit_forward.5} parent=11 // pred_check_branch
        %364 = sbr.rel (%p362) target = $region48
      $region47: #{deit_forward.5} parent=11 // pred_region
        _
      $region48: #{deit_forward.5} parent=11 // pred_fallthru
        _
      // Predicated region
      $region49: #{deit_forward.5} parent=11 // pred_check
        %p365 = pneg %p255
      $region50: #{deit_forward.5} parent=11 // pred_check_branch
        %367 = sbr.rel (%p365) target = $region52
      $region51: #{deit_forward.5} parent=11 // pred_region
        _
      $region52: #{deit_forward.5} parent=11 // pred_fallthru
        _
      // Predicated region
      $region53: #{deit_forward.5} parent=11 // pred_check
        %p368 = pneg %p276
      $region54: #{deit_forward.5} parent=11 // pred_check_branch
        %370 = sbr.rel (%p368) target = $region56
      $region55: #{deit_forward.5} parent=11 // pred_region
        _
      $region56: #{deit_forward.5} parent=11 // pred_fallthru
        _
      // Predicated region
      $region57: #{deit_forward.5} parent=11 // pred_check
        %p371 = pneg %p297
      $region58: #{deit_forward.5} parent=11 // pred_check_branch
        %373 = sbr.rel (%p371) target = $region60
      $region59: #{deit_forward.5} parent=11 // pred_region
        _
      $region60: #{deit_forward.5} parent=11 // pred_fallthru
        _
    $region12: #{deit_forward.5} parent=5 // pred_fallthru
      _
    %p374 = scmp.lt.s32.totalorder %s19, 2
    // Predicated region
    $region61: #{deit_forward.5} parent=5 // pred_check
      %p375 = pneg %p374
    $region62: #{deit_forward.5} parent=5 // pred_check_branch
      %377 = sbr.rel (%p375) target = $region64
    $region63: #{deit_forward.5} parent=5 // pred_region
      // Predicated region
      $region65: #{deit_forward.5} parent=63 // pred_check
        %p378 = pneg %p39
      $region66: #{deit_forward.5} parent=63 // pred_check_branch
        %380 = sbr.rel (%p378) target = $region68
      $region67: #{deit_forward.5} parent=63 // pred_region
        %p381 = scmp.lt.s32.totalorder %s19, 1
        %s382 = scalar_select %p381, %s19, 1
        %s383 = smul.addr %s382, 2
        %s384 = smul.addr %s383, 8
        %s385 = scalar_lea.vmem %s0, %s384
      $region68: #{deit_forward.5} parent=63 // pred_fallthru
        _
    $region64: #{deit_forward.5} parent=5 // pred_fallthru
      _
    %p386 = scmp.le.s32.totalorder 1, %s19
    %p387 = scmp.lt.s32.totalorder %s19, 3
    %p388 = pnand %p386, %p387
    %p389 = pneg %p388
    // Predicated region
    $region69: #{deit_forward.5} parent=5 // pred_check
      _
    $region70: #{deit_forward.5} parent=5 // pred_check_branch
      %391 = sbr.rel (%p388) target = $region72
    $region71: #{deit_forward.5} parent=5 // pred_region
      %s392 = ssub.s32 %s19, 1
      %p393 = scmp.lt.s32.totalorder %s24, 1
      %s394 = scalar_select %p393, %s24, 1
      %s395 = smul.addr %s394, 2
      %s396 = smul.addr %s395, 8
      %s397 = scalar_lea.vmem %s0, %s396
      %p398 = pneg %p45
      %p399 = pneg %p42
      %p400 = pneg %p66
      %p401 = pneg %p63
      %p402 = pneg %p87
      %p403 = pneg %p84
      %p404 = pneg %p108
      %p405 = pneg %p105
      %p406 = pneg %p129
      %p407 = pneg %p126
      %p408 = pneg %p150
      %p409 = pneg %p147
      %p410 = pneg %p171
      %p411 = pneg %p168
      %p412 = pneg %p192
      %p413 = pneg %p189
      %p414 = pneg %p213
      %p415 = pneg %p210
      %p416 = pneg %p234
      %p417 = pneg %p231
      %p418 = pneg %p255
      %p419 = pneg %p252
      %p420 = pneg %p276
      %p421 = pneg %p273
      %p422 = pneg %p297
      %p423 = pneg %p294
      %p424 = pneg %p323
      %p425 = pneg %p320
      %p426 = scmp.lt.s32.totalorder %s24, 1
      %s427 = scalar_select %p426, %s24, 1
      %s428 = smul.addr %s427, 2
      %s429 = smul.addr %s428, 8
      %s430 = scalar_lea.vmem %s13, %s429
      %p431 = scmp.lt.s32.totalorder %s24, 1
      %s432 = scalar_select %p431, %s24, 1
      %s433 = smul.addr %s432, 2
      %s434 = smul.addr %s433, 8
      %s435 = scalar_lea.vmem %s0, %s434
      %p436 = scmp.lt.s32.totalorder %s24, 1
      %s437 = scalar_select %p436, %s24, 1
      %s438 = smul.addr %s437, 2
      %s439 = smul.addr %s438, 8
      %s440 = scalar_lea.vmem %s13, %s439
      %v442 = vld [vmem:[%s435] sm:$0xff]
      %v443 = vld [vmem:[%s435 + $0x8] sm:$0xff]
      %v444 = vld [vmem:[%s1] sm:$0x1]
      %v445 = vld [vmem:[%s2] sm:$0x1]
      %vm446 = vcmask 261120
      %v447 = vsel %vm446, %v442, 0.0
      %448 = vadd.xlane.f32.xlu0 %v447
      %v449 = vpop.xlane.xlu0 %448
      %v450 = vsel %vm446, %v443, 0.0
      %451 = vadd.xlane.f32.xlu0 %v450
      %v452 = vpop.xlane.xlu0 %451
      %v453 = vrcp.pop 32.0
      %v454 = vmul.f32 %v449, %v453
      %v455 = vmul.f32 %v452, %v453
      %v456 = vsub.f32 %v442, %v454
      %v457 = vsub.f32 %v443, %v455
      %v458 = vmul.f32 %v456, %v456
      %v459 = vmul.f32 %v457, %v457
      %v460 = vsel %vm446, %v458, 0.0
      %461 = vadd.xlane.f32.xlu0 %v460
      %v462 = vpop.xlane.xlu0 %461
      %v463 = vsel %vm446, %v459, 0.0
      %464 = vadd.xlane.f32.xlu0 %v463
      %v465 = vpop.xlane.xlu0 %464
      %v466 = vmul.f32 %v462, %v453
      %v467 = vmul.f32 %v465, %v453
      %v468 = vadd.f32 %v466, 1e-05
      %v469 = vadd.f32 %v467, 1e-05
      %v470 = vrsqrt.pop %v468
      %v471 = vrsqrt.pop %v469
      %v472 = vmul.f32 %v456, %v470
      %v473 = vmul.f32 %v457, %v471
      %v475 = vlaneseq
      %v476 = vshrl.u32 %v475, 7
      %v477 = vsub.s32 0, %v476
      %v478 = vrot.slane %v444, %v477
      %v480 = vmul.f32 %v472, %v478
      %v481 = vmul.f32 %v473, %v478
      %v483 = vlaneseq
      %v484 = vshrl.u32 %v483, 7
      %v485 = vsub.s32 0, %v484
      %v486 = vrot.slane %v445, %v485
      %v488 = vadd.f32 %v480, %v486
      %v489 = vadd.f32 %v481, %v486
      %v490 = vpack.c.bf16 %v489, %v488
      %v491 = vld [vmem:[%s3] sm:$0xf]
      %v492 = vld [vmem:[%s3 + $0x4] sm:$0xf]
      %v493 = vld [vmem:[%s3 + $0x8] sm:$0xf]
      %v494 = vld [vmem:[%s3 + $0xc] sm:$0xf]
      %v495 = vld [vmem:[%s4] sm:$0x1]
      %v497 = vlaneseq
      %v498 = vshrl.u32 %v497, 7
      %v499 = vsub.s32 0, %v498
      %v500 = vrot.slane %v495, %v499
      %v506 = vunpack.c.l.b16 %v491
      %v507 = vunpack.c.l.b16 %v492
      %v508 = vunpack.c.l.b16 %v493
      %v509 = vunpack.c.l.b16 %v494
      %v510 = vpack.c.b16 %v507, %v506
      %v511 = vpack.c.b16 %v509, %v508
      %v515 = vsel %vm446, %v490, 0
      %517 = vmatprep.subr.bf16.mxu0 0
      %518 = vmatpush1.bf16.msra.mxu0 %v510
      %519 = vmatprep.subr.bf16.mxu0 0
      %520 = vmatpush1.bf16.msra.mxu0 %v511
      %521 = vmatprep.subr.bf16.mxu0 0
      %522 = vmatpush1.bf16.msra.mxu0 0
      %523 = vmatprep.subr.bf16.mxu0 0
      %524 = vmatpush1.bf16.msra.mxu0 0
      %525 = vmatprep.subr.bf16.mxu0 0
      %526 = vmatpush1.bf16.msra.mxu0 0
      %527 = vmatprep.subr.bf16.mxu0 0
      %528 = vmatpush1.bf16.msra.mxu0 0
      %529 = vmatprep.subr.bf16.mxu0 0
      %530 = vmatpush1.bf16.msra.mxu0 0
      %531 = vmatprep.subr.bf16.mxu0 0
      %532 = vmatpush1.bf16.msra.mxu0 0
      %533 = vmatprep.subr.bf16.mxu0 0
      %534 = vmatpush1.bf16.msra.mxu0 0
      %535 = vmatprep.subr.bf16.mxu0 0
      %536 = vmatpush1.bf16.msra.mxu0 0
      %537 = vmatprep.subr.bf16.mxu0 0
      %538 = vmatpush1.bf16.msra.mxu0 0
      %539 = vmatprep.subr.bf16.mxu0 0
      %540 = vmatpush1.bf16.msra.mxu0 0
      %541 = vmatprep.subr.bf16.mxu0 0
      %542 = vmatpush1.bf16.msra.mxu0 0
      %543 = vmatprep.subr.bf16.mxu0 0
      %544 = vmatpush1.bf16.msra.mxu0 0
      %545 = vmatprep.subr.bf16.mxu0 0
      %546 = vmatpush1.bf16.msra.mxu0 0
      %547 = vmatprep.subr.bf16.mxu0 0
      %548 = vmatpush1.bf16.msra.mxu0 0
      %549 = vmatprep.mubr.bf16.mxu0 0
      %550 = vmatmul.mubr.bf16.gmra.mrb[0].mxu0 %v515
      %v551 = vpop.f32.mrb[0].mxu0
      %v552 = vadd.f32 %v500, %v551
      %v553 = vpop.f32.mrb[0].mxu0
      %v554 = vpop.f32.mrb[0].mxu0
      %v555 = vadd.f32 %v500, %v554
      %v556 = vpop.f32.mrb[0].mxu0
      %557 = vdwg.mxu0
      %v558 = vpack.c.bf16 %v555, %v552
      %560 = vrot.lane.b32.xlu0 %v558, 120
      %v561 = vpop.permute.xlu0 %560
      %562 = vrot.lane.b32.xlu0 %v558, 112
      %v563 = vpop.permute.xlu0 %562
      %564 = vrot.lane.b32.xlu0 %v558, 104
      %v565 = vpop.permute.xlu0 %564
      %566 = vrot.lane.b32.xlu0 %v558, 96
      %v567 = vpop.permute.xlu0 %566
      %vm568 = vcmask 64512
      %v570 = vsel %vm568, %v558, 0
      %v573 = vsel %vm568, %v567, 0
      %575 = vmatprep.subr.bf16.mxu0 0
      %576 = vmatpush1.bf16.xpose.msra.mxu0 %v573
      %577 = vmatprep.subr.bf16.mxu0 0
      %578 = vmatpush1.bf16.xpose.msra.mxu0 0
      %579 = vmatprep.subr.bf16.mxu0 0
      %580 = vmatpush1.bf16.xpose.msra.mxu0 0
      %581 = vmatprep.subr.bf16.mxu0 0
      %582 = vmatpush1.bf16.xpose.msra.mxu0 0
      %583 = vmatprep.subr.bf16.mxu0 0
      %584 = vmatpush1.bf16.xpose.msra.mxu0 0
      %585 = vmatprep.subr.bf16.mxu0 0
      %586 = vmatpush1.bf16.xpose.msra.mxu0 0
      %587 = vmatprep.subr.bf16.mxu0 0
      %588 = vmatpush1.bf16.xpose.msra.mxu0 0
      %589 = vmatprep.subr.bf16.mxu0 0
      %590 = vmatpush1.bf16.xpose.msra.mxu0 0
      %591 = vmatprep.subr.bf16.mxu0 0
      %592 = vmatpush1.bf16.xpose.msra.mxu0 0
      %593 = vmatprep.subr.bf16.mxu0 0
      %594 = vmatpush1.bf16.xpose.msra.mxu0 0
      %595 = vmatprep.subr.bf16.mxu0 0
      %596 = vmatpush1.bf16.xpose.msra.mxu0 0
      %597 = vmatprep.subr.bf16.mxu0 0
      %598 = vmatpush1.bf16.xpose.msra.mxu0 0
      %599 = vmatprep.subr.bf16.mxu0 0
      %600 = vmatpush1.bf16.xpose.msra.mxu0 0
      %601 = vmatprep.subr.bf16.mxu0 0
      %602 = vmatpush1.bf16.xpose.msra.mxu0 0
      %603 = vmatprep.subr.bf16.mxu0 0
      %604 = vmatpush1.bf16.xpose.msra.mxu0 0
      %605 = vmatprep.subr.bf16.mxu0 0
      %606 = vmatpush1.bf16.xpose.msra.mxu0 0
      %607 = vmatprep.mubr.bf16.mxu0 0
      %608 = vmatmul.mubr.bf16.gmra.mrb[0].mxu0 %v570
      %v609 = vpop.f32.mrb[0].mxu0
      %v610 = vadd.f32 0.0, %v609
      %v611 = vpop.f32.mrb[0].mxu0
      %v612 = vpop.f32.mrb[0].mxu0
      %v613 = vadd.f32 0.0, %v612
      %v614 = vpop.f32.mrb[0].mxu0
      %615 = vdwg.mxu0
      %616 = vrot.lane.b32.xlu0 %v561, 96
      %v617 = vpop.permute.xlu0 %616
      %v619 = vsel %vm568, %v561, 0
      %v622 = vsel %vm568, %v617, 0
      %624 = vmatprep.subr.bf16.mxu0 0
      %625 = vmatpush1.bf16.xpose.msra.mxu0 %v622
      %626 = vmatprep.subr.bf16.mxu0 0
      %627 = vmatpush1.bf16.xpose.msra.mxu0 0
      %628 = vmatprep.subr.bf16.mxu0 0
      %629 = vmatpush1.bf16.xpose.msra.mxu0 0
      %630 = vmatprep.subr.bf16.mxu0 0
      %631 = vmatpush1.bf16.xpose.msra.mxu0 0
      %632 = vmatprep.subr.bf16.mxu0 0
      %633 = vmatpush1.bf16.xpose.msra.mxu0 0
      %634 = vmatprep.subr.bf16.mxu0 0
      %635 = vmatpush1.bf16.xpose.msra.mxu0 0
      %636 = vmatprep.subr.bf16.mxu0 0
      %637 = vmatpush1.bf16.xpose.msra.mxu0 0
      %638 = vmatprep.subr.bf16.mxu0 0
      %639 = vmatpush1.bf16.xpose.msra.mxu0 0
      %640 = vmatprep.subr.bf16.mxu0 0
      %641 = vmatpush1.bf16.xpose.msra.mxu0 0
      %642 = vmatprep.subr.bf16.mxu0 0
      %643 = vmatpush1.bf16.xpose.msra.mxu0 0
      %644 = vmatprep.subr.bf16.mxu0 0
      %645 = vmatpush1.bf16.xpose.msra.mxu0 0
      %646 = vmatprep.subr.bf16.mxu0 0
      %647 = vmatpush1.bf16.xpose.msra.mxu0 0
      %648 = vmatprep.subr.bf16.mxu0 0
      %649 = vmatpush1.bf16.xpose.msra.mxu0 0
      %650 = vmatprep.subr.bf16.mxu0 0
      %651 = vmatpush1.bf16.xpose.msra.mxu0 0
      %652 = vmatprep.subr.bf16.mxu0 0
      %653 = vmatpush1.bf16.xpose.msra.mxu0 0
      %654 = vmatprep.subr.bf16.mxu0 0
      %655 = vmatpush1.bf16.xpose.msra.mxu0 0
      %656 = vmatprep.mubr.bf16.mxu0 0
      %657 = vmatmul.mubr.bf16.gmra.mrb[0].mxu0 %v619
      %v658 = vpop.f32.mrb[0].mxu0
      %v659 = vadd.f32 0.0, %v658
      %v660 = vpop.f32.mrb[0].mxu0
      %v661 = vpop.f32.mrb[0].mxu0
      %v662 = vadd.f32 0.0, %v661
      %v663 = vpop.f32.mrb[0].mxu0
      %664 = vdwg.mxu0
      %665 = vrot.lane.b32.xlu0 %v563, 96
      %v666 = vpop.permute.xlu0 %665
      %v668 = vsel %vm568, %v563, 0
      %v671 = vsel %vm568, %v666, 0
      %673 = vmatprep.subr.bf16.mxu0 0
      %674 = vmatpush1.bf16.xpose.msra.mxu0 %v671
      %675 = vmatprep.subr.bf16.mxu0 0
      %676 = vmatpush1.bf16.xpose.msra.mxu0 0
      %677 = vmatprep.subr.bf16.mxu0 0
      %678 = vmatpush1.bf16.xpose.msra.mxu0 0
      %679 = vmatprep.subr.bf16.mxu0 0
      %680 = vmatpush1.bf16.xpose.msra.mxu0 0
      %681 = vmatprep.subr.bf16.mxu0 0
      %682 = vmatpush1.bf16.xpose.msra.mxu0 0
      %683 = vmatprep.subr.bf16.mxu0 0
      %684 = vmatpush1.bf16.xpose.msra.mxu0 0
      %685 = vmatprep.subr.bf16.mxu0 0
      %686 = vmatpush1.bf16.xpose.msra.mxu0 0
      %687 = vmatprep.subr.bf16.mxu0 0
      %688 = vmatpush1.bf16.xpose.msra.mxu0 0
      %689 = vmatprep.subr.bf16.mxu0 0
      %690 = vmatpush1.bf16.xpose.msra.mxu0 0
      %691 = vmatprep.subr.bf16.mxu0 0
      %692 = vmatpush1.bf16.xpose.msra.mxu0 0
      %693 = vmatprep.subr.bf16.mxu0 0
      %694 = vmatpush1.bf16.xpose.msra.mxu0 0
      %695 = vmatprep.subr.bf16.mxu0 0
      %696 = vmatpush1.bf16.xpose.msra.mxu0 0
      %697 = vmatprep.subr.bf16.mxu0 0
      %698 = vmatpush1.bf16.xpose.msra.mxu0 0
      %699 = vmatprep.subr.bf16.mxu0 0
      %700 = vmatpush1.bf16.xpose.msra.mxu0 0
      %701 = vmatprep.subr.bf16.mxu0 0
      %702 = vmatpush1.bf16.xpose.msra.mxu0 0
      %703 = vmatprep.subr.bf16.mxu0 0
      %704 = vmatpush1.bf16.xpose.msra.mxu0 0
      %705 = vmatprep.mubr.bf16.mxu0 0
      %706 = vmatmul.mubr.bf16.gmra.mrb[0].mxu0 %v668
      %v707 = vpop.f32.mrb[0].mxu0
      %v708 = vadd.f32 0.0, %v707
      %v709 = vpop.f32.mrb[0].mxu0
      %v710 = vpop.f32.mrb[0].mxu0
      %v711 = vadd.f32 0.0, %v710
      %v712 = vpop.f32.mrb[0].mxu0
      %713 = vdwg.mxu0
      %714 = vrot.lane.b32.xlu0 %v565, 96
      %v715 = vpop.permute.xlu0 %714
      %v717 = vsel %vm568, %v565, 0
      %v720 = vsel %vm568, %v715, 0
      %722 = vmatprep.subr.bf16.mxu0 0
      %723 = vmatpush1.bf16.xpose.msra.mxu0 %v720
      %724 = vmatprep.subr.bf16.mxu0 0
      %725 = vmatpush1.bf16.xpose.msra.mxu0 0
      %726 = vmatprep.subr.bf16.mxu0 0
      %727 = vmatpush1.bf16.xpose.msra.mxu0 0
      %728 = vmatprep.subr.bf16.mxu0 0
      %729 = vmatpush1.bf16.xpose.msra.mxu0 0
      %730 = vmatprep.subr.bf16.mxu0 0
      %731 = vmatpush1.bf16.xpose.msra.mxu0 0
      %732 = vmatprep.subr.bf16.mxu0 0
      %733 = vmatpush1.bf16.xpose.msra.mxu0 0
      %734 = vmatprep.subr.bf16.mxu0 0
      %735 = vmatpush1.bf16.xpose.msra.mxu0 0
      %736 = vmatprep.subr.bf16.mxu0 0
      %737 = vmatpush1.bf16.xpose.msra.mxu0 0
      %738 = vmatprep.subr.bf16.mxu0 0
      %739 = vmatpush1.bf16.xpose.msra.mxu0 0
      %740 = vmatprep.subr.bf16.mxu0 0
      %741 = vmatpush1.bf16.xpose.msra.mxu0 0
      %742 = vmatprep.subr.bf16.mxu0 0
      %743 = vmatpush1.bf16.xpose.msra.mxu0 0
      %744 = vmatprep.subr.bf16.mxu0 0
      %745 = vmatpush1.bf16.xpose.msra.mxu0 0
      %746 = vmatprep.subr.bf16.mxu0 0
      %747 = vmatpush1.bf16.xpose.msra.mxu0 0
      %748 = vmatprep.subr.bf16.mxu0 0
      %749 = vmatpush1.bf16.xpose.msra.mxu0 0
      %750 = vmatprep.subr.bf16.mxu0 0
      %751 = vmatpush1.bf16.xpose.msra.mxu0 0
      %752 = vmatprep.subr.bf16.mxu0 0
      %753 = vmatpush1.bf16.xpose.msra.mxu0 0
      %754 = vmatprep.mubr.bf16.mxu0 0
      %755 = vmatmul.mubr.bf16.gmra.mrb[0].mxu0 %v717
      %v756 = vpop.f32.mrb[0].mxu0
      %v757 = vadd.f32 0.0, %v756
      %v758 = vpop.f32.mrb[0].mxu0
      %v759 = vpop.f32.mrb[0].mxu0
      %v760 = vadd.f32 0.0, %v759
      %v761 = vpop.f32.mrb[0].mxu0
      %762 = vdwg.mxu0
      %v763 = vlaneseq
      %v764 = vand.u32 %v763, 127
      %vm765 = vcmp.lt.s32.totalorder %v764, 5
      %v766 = vsel %vm765, 1, 0
      %vm767 = vcmp.eq.s32.totalorder %v766, 1
      %v768 = vsel %vm767, %v610, -1e+30
      %v769 = vsel %vm767, %v613, -1e+30
      %v770 = vsel %vm767, %v659, -1e+30
      %v771 = vsel %vm767, %v662, -1e+30
      %v772 = vsel %vm767, %v708, -1e+30
      %v773 = vsel %vm767, %v711, -1e+30
      %v774 = vsel %vm767, %v757, -1e+30
      %v775 = vsel %vm767, %v760, -1e+30
      %vm776 = vcmask 130048
      %v777 = vsel %vm776, %v768, -inf
      %778 = vmax.xlane.f32.xlu0 %v777
      %v779 = vpop.xlane.xlu0 %778
      %v780 = vsel %vm776, %v769, -inf
      %781 = vmax.xlane.f32.xlu0 %v780
      %v782 = vpop.xlane.xlu0 %781
      %v783 = vsel %vm776, %v770, -inf
      %784 = vmax.xlane.f32.xlu0 %v783
      %v785 = vpop.xlane.xlu0 %784
      %v786 = vsel %vm776, %v771, -inf
      %787 = vmax.xlane.f32.xlu0 %v786
      %v788 = vpop.xlane.xlu0 %787
      %v789 = vsel %vm776, %v772, -inf
      %790 = vmax.xlane.f32.xlu0 %v789
      %v791 = vpop.xlane.xlu0 %790
      %v792 = vsel %vm776, %v773, -inf
      %793 = vmax.xlane.f32.xlu0 %v792
      %v794 = vpop.xlane.xlu0 %793
      %v795 = vsel %vm776, %v774, -inf
      %796 = vmax.xlane.f32.xlu0 %v795
      %v797 = vpop.xlane.xlu0 %796
      %v798 = vsel %vm776, %v775, -inf
      %799 = vmax.xlane.f32.xlu0 %v798
      %v800 = vpop.xlane.xlu0 %799
      %v801 = vsub.f32 %v768, %v779
      %v802 = vsub.f32 %v769, %v782
      %v803 = vsub.f32 %v770, %v785
      %v804 = vsub.f32 %v771, %v788
      %v805 = vsub.f32 %v772, %v791
      %v806 = vsub.f32 %v773, %v794
      %v807 = vsub.f32 %v774, %v797
      %v808 = vsub.f32 %v775, %v800
      %v809 = vmul.f32 %v801, 1.442695
      %v810 = vpow.pop %v809
      %v811 = vmul.f32 %v802, 1.442695
      %v812 = vpow.pop %v811
      %v813 = vmul.f32 %v803, 1.442695
      %v814 = vpow.pop %v813
      %v815 = vmul.f32 %v804, 1.442695
      %v816 = vpow.pop %v815
      %v817 = vmul.f32 %v805, 1.442695
      %v818 = vpow.pop %v817
      %v819 = vmul.f32 %v806, 1.442695
      %v820 = vpow.pop %v819
      %v821 = vmul.f32 %v807, 1.442695
      %v822 = vpow.pop %v821
      %v823 = vmul.f32 %v808, 1.442695
      %v824 = vpow.pop %v823
      %v825 = vsel %vm776, %v810, 0.0
      %826 = vadd.xlane.f32.xlu0 %v825
      %v827 = vpop.xlane.xlu0 %826
      %v828 = vsel %vm776, %v812, 0.0
      %829 = vadd.xlane.f32.xlu0 %v828
      %v830 = vpop.xlane.xlu0 %829
      %v831 = vsel %vm776, %v814, 0.0
      %832 = vadd.xlane.f32.xlu0 %v831
      %v833 = vpop.xlane.xlu0 %832
      %v834 = vsel %vm776, %v816, 0.0
      %835 = vadd.xlane.f32.xlu0 %v834
      %v836 = vpop.xlane.xlu0 %835
      %v837 = vsel %vm776, %v818, 0.0
      %838 = vadd.xlane.f32.xlu0 %v837
      %v839 = vpop.xlane.xlu0 %838
      %v840 = vsel %vm776, %v820, 0.0
      %841 = vadd.xlane.f32.xlu0 %v840
      %v842 = vpop.xlane.xlu0 %841
      %v843 = vsel %vm776, %v822, 0.0
      %844 = vadd.xlane.f32.xlu0 %v843
      %v845 = vpop.xlane.xlu0 %844
      %v846 = vsel %vm776, %v824, 0.0
      %847 = vadd.xlane.f32.xlu0 %v846
      %v848 = vpop.xlane.xlu0 %847
      %v849 = vrcp.pop %v827
      %v850 = vrcp.pop %v830
      %v851 = vrcp.pop %v833
      %v852 = vrcp.pop %v836
      %v853 = vrcp.pop %v839
      %v854 = vrcp.pop %v842
      %v855 = vrcp.pop %v845
      %v856 = vrcp.pop %v848
      %v857 = vmul.f32 %v810, %v849
      %v858 = vmul.f32 %v812, %v850
      %v859 = vmul.f32 %v814, %v851
      %v860 = vmul.f32 %v816, %v852
      %v861 = vmul.f32 %v818, %v853
      %v862 = vmul.f32 %v820, %v854
      %v863 = vmul.f32 %v822, %v855
      %v864 = vmul.f32 %v824, %v856
      %v865 = vpack.c.bf16 %v858, %v857
      %v866 = vpack.c.bf16 %v860, %v859
      %v867 = vpack.c.bf16 %v862, %v861
      %v868 = vpack.c.bf16 %v864, %v863
      %869 = vrot.lane.b32.xlu0 %v558, 64
      %v870 = vpop.permute.xlu0 %869
      %v873 = vsel %vm776, %v865, 0
      %875 = vmatprep.subr.bf16.mxu0 0
      %876 = vmatpush1.bf16.msra.mxu0 %v870
      %877 = vmatprep.subr.bf16.mxu0 0
      %878 = vmatpush1.bf16.msra.mxu0 0
      %879 = vmatprep.subr.bf16.mxu0 0
      %880 = vmatpush1.bf16.msra.mxu0 0
      %881 = vmatprep.subr.bf16.mxu0 0
      %882 = vmatpush1.bf16.msra.mxu0 0
      %883 = vmatprep.subr.bf16.mxu0 0
      %884 = vmatpush1.bf16.msra.mxu0 0
      %885 = vmatprep.subr.bf16.mxu0 0
      %886 = vmatpush1.bf16.msra.mxu0 0
      %887 = vmatprep.subr.bf16.mxu0 0
      %888 = vmatpush1.bf16.msra.mxu0 0
      %889 = vmatprep.subr.bf16.mxu0 0
      %890 = vmatpush1.bf16.msra.mxu0 0
      %891 = vmatprep.subr.bf16.mxu0 0
      %892 = vmatpush1.bf16.msra.mxu0 0
      %893 = vmatprep.subr.bf16.mxu0 0
      %894 = vmatpush1.bf16.msra.mxu0 0
      %895 = vmatprep.subr.bf16.mxu0 0
      %896 = vmatpush1.bf16.msra.mxu0 0
      %897 = vmatprep.subr.bf16.mxu0 0
      %898 = vmatpush1.bf16.msra.mxu0 0
      %899 = vmatprep.subr.bf16.mxu0 0
      %900 = vmatpush1.bf16.msra.mxu0 0
      %901 = vmatprep.subr.bf16.mxu0 0
      %902 = vmatpush1.bf16.msra.mxu0 0
      %903 = vmatprep.subr.bf16.mxu0 0
      %904 = vmatpush1.bf16.msra.mxu0 0
      %905 = vmatprep.subr.bf16.mxu0 0
      %906 = vmatpush1.bf16.msra.mxu0 0
      %907 = vmatprep.mubr.bf16.mxu0 0
      %908 = vmatmul.mubr.bf16.gmra.mrb[0].mxu0 %v873
      %v909 = vpop.f32.mrb[0].mxu0
      %v910 = vadd.f32 0.0, %v909
      %v911 = vpop.f32.mrb[0].mxu0
      %v912 = vpop.f32.mrb[0].mxu0
      %v913 = vadd.f32 0.0, %v912
      %v914 = vpop.f32.mrb[0].mxu0
      %915 = vdwg.mxu0
      %916 = vrot.lane.b32.xlu0 %v561, 64
      %v917 = vpop.permute.xlu0 %916
      %v920 = vsel %vm776, %v866, 0
      %922 = vmatprep.subr.bf16.mxu0 0
      %923 = vmatpush1.bf16.msra.mxu0 %v917
      %924 = vmatprep.subr.bf16.mxu0 0
      %925 = vmatpush1.bf16.msra.mxu0 0
      %926 = vmatprep.subr.bf16.mxu0 0
      %927 = vmatpush1.bf16.msra.mxu0 0
      %928 = vmatprep.subr.bf16.mxu0 0
      %929 = vmatpush1.bf16.msra.mxu0 0
      %930 = vmatprep.subr.bf16.mxu0 0
      %931 = vmatpush1.bf16.msra.mxu0 0
      %932 = vmatprep.subr.bf16.mxu0 0
      %933 = vmatpush1.bf16.msra.mxu0 0
      %934 = vmatprep.subr.bf16.mxu0 0
      %935 = vmatpush1.bf16.msra.mxu0 0
      %936 = vmatprep.subr.bf16.mxu0 0
      %937 = vmatpush1.bf16.msra.mxu0 0
      %938 = vmatprep.subr.bf16.mxu0 0
      %939 = vmatpush1.bf16.msra.mxu0 0
      %940 = vmatprep.subr.bf16.mxu0 0
      %941 = vmatpush1.bf16.msra.mxu0 0
      %942 = vmatprep.subr.bf16.mxu0 0
      %943 = vmatpush1.bf16.msra.mxu0 0
      %944 = vmatprep.subr.bf16.mxu0 0
      %945 = vmatpush1.bf16.msra.mxu0 0
      %946 = vmatprep.subr.bf16.mxu0 0
      %947 = vmatpush1.bf16.msra.mxu0 0
      %948 = vmatprep.subr.bf16.mxu0 0
      %949 = vmatpush1.bf16.msra.mxu0 0
      %950 = vmatprep.subr.bf16.mxu0 0
      %951 = vmatpush1.bf16.msra.mxu0 0
      %952 = vmatprep.subr.bf16.mxu0 0
      %953 = vmatpush1.bf16.msra.mxu0 0
      %954 = vmatprep.mubr.bf16.mxu0 0
      %955 = vmatmul.mubr.bf16.gmra.mrb[0].mxu0 %v920
      %v956 = vpop.f32.mrb[0].mxu0
      %v957 = vadd.f32 0.0, %v956
      %v958 = vpop.f32.mrb[0].mxu0
      %v959 = vpop.f32.mrb[0].mxu0
      %v960 = vadd.f32 0.0, %v959
      %v961 = vpop.f32.mrb[0].mxu0
      %962 = vdwg.mxu0
      %963 = vrot.lane.b32.xlu0 %v563, 64
      %v964 = vpop.permute.xlu0 %963
      %v967 = vsel %vm776, %v867, 0
      %969 = vmatprep.subr.bf16.mxu0 0
      %970 = vmatpush1.bf16.msra.mxu0 %v964
      %971 = vmatprep.subr.bf16.mxu0 0
      %972 = vmatpush1.bf16.msra.mxu0 0
      %973 = vmatprep.subr.bf16.mxu0 0
      %974 = vmatpush1.bf16.msra.mxu0 0
      %975 = vmatprep.subr.bf16.mxu0 0
      %976 = vmatpush1.bf16.msra.mxu0 0
      %977 = vmatprep.subr.bf16.mxu0 0
      %978 = vmatpush1.bf16.msra.mxu0 0
      %979 = vmatprep.subr.bf16.mxu0 0
      %980 = vmatpush1.bf16.msra.mxu0 0
      %981 = vmatprep.subr.bf16.mxu0 0
      %982 = vmatpush1.bf16.msra.mxu0 0
      %983 = vmatprep.subr.bf16.mxu0 0
      %984 = vmatpush1.bf16.msra.mxu0 0
      %985 = vmatprep.subr.bf16.mxu0 0
      %986 = vmatpush1.bf16.msra.mxu0 0
      %987 = vmatprep.subr.bf16.mxu0 0
      %988 = vmatpush1.bf16.msra.mxu0 0
      %989 = vmatprep.subr.bf16.mxu0 0
      %990 = vmatpush1.bf16.msra.mxu0 0
      %991 = vmatprep.subr.bf16.mxu0 0
      %992 = vmatpush1.bf16.msra.mxu0 0
      %993 = vmatprep.subr.bf16.mxu0 0
      %994 = vmatpush1.bf16.msra.mxu0 0
      %995 = vmatprep.subr.bf16.mxu0 0
      %996 = vmatpush1.bf16.msra.mxu0 0
      %997 = vmatprep.subr.bf16.mxu0 0
      %998 = vmatpush1.bf16.msra.mxu0 0
      %999 = vmatprep.subr.bf16.mxu0 0
      %1000 = vmatpush1.bf16.msra.mxu0 0
      %1001 = vmatprep.mubr.bf16.mxu0 0
      %1002 = vmatmul.mubr.bf16.gmra.mrb[0].mxu0 %v967
      %v1003 = vpop.f32.mrb[0].mxu0
      %v1004 = vadd.f32 0.0, %v1003
      %v1005 = vpop.f32.mrb[0].mxu0
      %v1006 = vpop.f32.mrb[0].mxu0
      %v1007 = vadd.f32 0.0, %v1006
      %v1008 = vpop.f32.mrb[0].mxu0
      %1009 = vdwg.mxu0
      %1010 = vrot.lane.b32.xlu0 %v565, 64
      %v1011 = vpop.permute.xlu0 %1010
      %v1014 = vsel %vm776, %v868, 0
      %1016 = vmatprep.subr.bf16.mxu0 0
      %1017 = vmatpush1.bf16.msra.mxu0 %v1011
      %1018 = vmatprep.subr.bf16.mxu0 0
      %1019 = vmatpush1.bf16.msra.mxu0 0
      %1020 = vmatprep.subr.bf16.mxu0 0
      %1021 = vmatpush1.bf16.msra.mxu0 0
      %1022 = vmatprep.subr.bf16.mxu0 0
      %1023 = vmatpush1.bf16.msra.mxu0 0
      %1024 = vmatprep.subr.bf16.mxu0 0
      %1025 = vmatpush1.bf16.msra.mxu0 0
      %1026 = vmatprep.subr.bf16.mxu0 0
      %1027 = vmatpush1.bf16.msra.mxu0 0
      %1028 = vmatprep.subr.bf16.mxu0 0
      %1029 = vmatpush1.bf16.msra.mxu0 0
      %1030 = vmatprep.subr.bf16.mxu0 0
      %1031 = vmatpush1.bf16.msra.mxu0 0
      %1032 = vmatprep.subr.bf16.mxu0 0
      %1033 = vmatpush1.bf16.msra.mxu0 0
      %1034 = vmatprep.subr.bf16.mxu0 0
      %1035 = vmatpush1.bf16.msra.mxu0 0
      %1036 = vmatprep.subr.bf16.mxu0 0
      %1037 = vmatpush1.bf16.msra.mxu0 0
      %1038 = vmatprep.subr.bf16.mxu0 0
      %1039 = vmatpush1.bf16.msra.mxu0 0
      %1040 = vmatprep.subr.bf16.mxu0 0
      %1041 = vmatpush1.bf16.msra.mxu0 0
      %1042 = vmatprep.subr.bf16.mxu0 0
      %1043 = vmatpush1.bf16.msra.mxu0 0
      %1044 = vmatprep.subr.bf16.mxu0 0
      %1045 = vmatpush1.bf16.msra.mxu0 0
      %1046 = vmatprep.subr.bf16.mxu0 0
      %1047 = vmatpush1.bf16.msra.mxu0 0
      %1048 = vmatprep.mubr.bf16.mxu0 0
      %1049 = vmatmul.mubr.bf16.gmra.mrb[0].mxu0 %v1014
      %v1050 = vpop.f32.mrb[0].mxu0
      %v1051 = vadd.f32 0.0, %v1050
      %v1052 = vpop.f32.mrb[0].mxu0
      %v1053 = vpop.f32.mrb[0].mxu0
      %v1054 = vadd.f32 0.0, %v1053
      %v1055 = vpop.f32.mrb[0].mxu0
      %1056 = vdwg.mxu0
      %v1057 = vpack.c.bf16 %v913, %v910
      %v1058 = vpack.c.bf16 %v960, %v957
      %v1059 = vpack.c.bf16 %v1007, %v1004
      %v1060 = vpack.c.bf16 %v1054, %v1051
      %1062 = vrot.lane.b32.xlu0 %v1058, 8
      %v1063 = vpop.permute.xlu0 %1062
      %1065 = vrot.lane.b32.xlu0 %v1059, 16
      %v1066 = vpop.permute.xlu0 %1065
      %1068 = vrot.lane.b32.xlu0 %v1060, 24
      %v1069 = vpop.permute.xlu0 %1068
      %v1072 = vsel %vm568, %v1057, %v1063
      %v1074 = vsel %vm776, %v1072, %v1066
      %vm1075 = vcmask 195584
      %v1077 = vsel %vm1075, %v1074, %v1069
      %v1078 = vld [vmem:[%s5] sm:$0xf]
      %v1079 = vld [vmem:[%s5 + $0x4] sm:$0xf]
      %v1080 = vld [vmem:[%s5 + $0x8] sm:$0xf]
      %v1081 = vld [vmem:[%s5 + $0xc] sm:$0xf]
      %v1082 = vld [vmem:[%s6] sm:$0x1]
      %v1084 = vlaneseq
      %v1085 = vshrl.u32 %v1084, 7
      %v1086 = vsub.s32 0, %v1085
      %v1087 = vrot.slane %v1082, %v1086
      %v1093 = vunpack.c.l.b16 %v1078
      %v1094 = vunpack.c.l.b16 %v1079
      %v1095 = vunpack.c.l.b16 %v1080
      %v1096 = vunpack.c.l.b16 %v1081
      %v1097 = vpack.c.b16 %v1094, %v1093
      %v1098 = vpack.c.b16 %v1096, %v1095
      %v1101 = vsel %vm446, %v1077, 0
      %1103 = vmatprep.subr.bf16.mxu0 0
      %1104 = vmatpush1.bf16.msra.mxu0 %v1097
      %1105 = vmatprep.subr.bf16.mxu0 0
      %1106 = vmatpush1.bf16.msra.mxu0 %v1098
      %1107 = vmatprep.subr.bf16.mxu0 0
      %1108 = vmatpush1.bf16.msra.mxu0 0
      %1109 = vmatprep.subr.bf16.mxu0 0
      %1110 = vmatpush1.bf16.msra.mxu0 0
      %1111 = vmatprep.subr.bf16.mxu0 0
      %1112 = vmatpush1.bf16.msra.mxu0 0
      %1113 = vmatprep.subr.bf16.mxu0 0
      %1114 = vmatpush1.bf16.msra.mxu0 0
      %1115 = vmatprep.subr.bf16.mxu0 0
      %1116 = vmatpush1.bf16.msra.mxu0 0
      %1117 = vmatprep.subr.bf16.mxu0 0
      %1118 = vmatpush1.bf16.msra.mxu0 0
      %1119 = vmatprep.subr.bf16.mxu0 0
      %1120 = vmatpush1.bf16.msra.mxu0 0
      %1121 = vmatprep.subr.bf16.mxu0 0
      %1122 = vmatpush1.bf16.msra.mxu0 0
      %1123 = vmatprep.subr.bf16.mxu0 0
      %1124 = vmatpush1.bf16.msra.mxu0 0
      %1125 = vmatprep.subr.bf16.mxu0 0
      %1126 = vmatpush1.bf16.msra.mxu0 0
      %1127 = vmatprep.subr.bf16.mxu0 0
      %1128 = vmatpush1.bf16.msra.mxu0 0
      %1129 = vmatprep.subr.bf16.mxu0 0
      %1130 = vmatpush1.bf16.msra.mxu0 0
      %1131 = vmatprep.subr.bf16.mxu0 0
      %1132 = vmatpush1.bf16.msra.mxu0 0
      %1133 = vmatprep.subr.bf16.mxu0 0
      %1134 = vmatpush1.bf16.msra.mxu0 0
      %1135 = vmatprep.mubr.bf16.mxu0 0
      %1136 = vmatmul.mubr.bf16.gmra.mrb[0].mxu0 %v1101
      %v1137 = vpop.f32.mrb[0].mxu0
      %v1138 = vadd.f32 %v1087, %v1137
      %v1139 = vpop.f32.mrb[0].mxu0
      %v1140 = vpop.f32.mrb[0].mxu0
      %v1141 = vadd.f32 %v1087, %v1140
      %v1142 = vpop.f32.mrb[0].mxu0
      %1143 = vdwg.mxu0
      %v1144 = vadd.f32 %v442, %v1138
      %v1145 = vadd.f32 %v443, %v1141
      %v1146 = vld [vmem:[%s7] sm:$0x1]
      %v1147 = vld [vmem:[%s8] sm:$0x1]
      %v1148 = vsel %vm446, %v1144, 0.0
      %1149 = vadd.xlane.f32.xlu0 %v1148
      %v1150 = vpop.xlane.xlu0 %1149
      %v1151 = vsel %vm446, %v1145, 0.0
      %1152 = vadd.xlane.f32.xlu0 %v1151
      %v1153 = vpop.xlane.xlu0 %1152
      %v1154 = vmul.f32 %v1150, %v453
      %v1155 = vmul.f32 %v1153, %v453
      %v1156 = vsub.f32 %v1144, %v1154
      %v1157 = vsub.f32 %v1145, %v1155
      %v1158 = vmul.f32 %v1156, %v1156
      %v1159 = vmul.f32 %v1157, %v1157
      %v1160 = vsel %vm446, %v1158, 0.0
      %1161 = vadd.xlane.f32.xlu0 %v1160
      %v1162 = vpop.xlane.xlu0 %1161
      %v1163 = vsel %vm446, %v1159, 0.0
      %1164 = vadd.xlane.f32.xlu0 %v1163
      %v1165 = vpop.xlane.xlu0 %1164
      %v1166 = vmul.f32 %v1162, %v453
      %v1167 = vmul.f32 %v1165, %v453
      %v1168 = vadd.f32 %v1166, 1e-05
      %v1169 = vadd.f32 %v1167, 1e-05
      %v1170 = vrsqrt.pop %v1168
      %v1171 = vrsqrt.pop %v1169
      %v1172 = vmul.f32 %v1156, %v1170
      %v1173 = vmul.f32 %v1157, %v1171
      %v1175 = vlaneseq
      %v1176 = vshrl.u32 %v1175, 7
      %v1177 = vsub.s32 0, %v1176
      %v1178 = vrot.slane %v1146, %v1177
      %v1180 = vmul.f32 %v1172, %v1178
      %v1181 = vmul.f32 %v1173, %v1178
      %v1183 = vlaneseq
      %v1184 = vshrl.u32 %v1183, 7
      %v1185 = vsub.s32 0, %v1184
      %v1186 = vrot.slane %v1147, %v1185
      %v1188 = vadd.f32 %v1180, %v1186
      %v1189 = vadd.f32 %v1181, %v1186
      %v1190 = vpack.c.bf16 %v1189, %v1188
      %v1191 = vld [vmem:[%s9] sm:$0xf]
      %v1192 = vld [vmem:[%s9 + $0x4] sm:$0xf]
      %v1193 = vld [vmem:[%s9 + $0x8] sm:$0xf]
      %v1194 = vld [vmem:[%s9 + $0xc] sm:$0xf]
      %v1195 = vld [vmem:[%s10] sm:$0x1]
      %v1197 = vlaneseq
      %v1198 = vshrl.u32 %v1197, 7
      %v1199 = vsub.s32 0, %v1198
      %v1200 = vrot.slane %v1195, %v1199
      %v1206 = vunpack.c.l.b16 %v1191
      %v1207 = vunpack.c.l.b16 %v1192
      %v1208 = vunpack.c.l.b16 %v1193
      %v1209 = vunpack.c.l.b16 %v1194
      %v1210 = vpack.c.b16 %v1207, %v1206
      %v1211 = vpack.c.b16 %v1209, %v1208
      %v1215 = vsel %vm446, %v1190, 0
      %1217 = vmatprep.subr.bf16.mxu0 0
      %1218 = vmatpush1.bf16.msra.mxu0 %v1210
      %1219 = vmatprep.subr.bf16.mxu0 0
      %1220 = vmatpush1.bf16.msra.mxu0 %v1211
      %1221 = vmatprep.subr.bf16.mxu0 0
      %1222 = vmatpush1.bf16.msra.mxu0 0
      %1223 = vmatprep.subr.bf16.mxu0 0
      %1224 = vmatpush1.bf16.msra.mxu0 0
      %1225 = vmatprep.subr.bf16.mxu0 0
      %1226 = vmatpush1.bf16.msra.mxu0 0
      %1227 = vmatprep.subr.bf16.mxu0 0
      %1228 = vmatpush1.bf16.msra.mxu0 0
      %1229 = vmatprep.subr.bf16.mxu0 0
      %1230 = vmatpush1.bf16.msra.mxu0 0
      %1231 = vmatprep.subr.bf16.mxu0 0
      %1232 = vmatpush1.bf16.msra.mxu0 0
      %1233 = vmatprep.subr.bf16.mxu0 0
      %1234 = vmatpush1.bf16.msra.mxu0 0
      %1235 = vmatprep.subr.bf16.mxu0 0
      %1236 = vmatpush1.bf16.msra.mxu0 0
      %1237 = vmatprep.subr.bf16.mxu0 0
      %1238 = vmatpush1.bf16.msra.mxu0 0
      %1239 = vmatprep.subr.bf16.mxu0 0
      %1240 = vmatpush1.bf16.msra.mxu0 0
      %1241 = vmatprep.subr.bf16.mxu0 0
      %1242 = vmatpush1.bf16.msra.mxu0 0
      %1243 = vmatprep.subr.bf16.mxu0 0
      %1244 = vmatpush1.bf16.msra.mxu0 0
      %1245 = vmatprep.subr.bf16.mxu0 0
      %1246 = vmatpush1.bf16.msra.mxu0 0
      %1247 = vmatprep.subr.bf16.mxu0 0
      %1248 = vmatpush1.bf16.msra.mxu0 0
      %1249 = vmatprep.mubr.bf16.mxu0 0
      %1250 = vmatmul.mubr.bf16.gmra.mrb[0].mxu0 %v1215
      %v1251 = vpop.f32.mrb[0].mxu0
      %v1252 = vadd.f32 %v1200, %v1251
      %v1253 = vpop.f32.mrb[0].mxu0
      %v1254 = vpop.f32.mrb[0].mxu0
      %v1255 = vadd.f32 %v1200, %v1254
      %v1256 = vpop.f32.mrb[0].mxu0
      %1257 = vdwg.mxu0
      %v1258 = vmul.f32 %v1252, 0.5
      %v1259 = vmul.f32 %v1255, 0.5
      %v1260 = vmul.f32 %v1252, 0.044715
      %v1261 = vmul.f32 %v1255, 0.044715
      %v1262 = vmul.f32 %v1260, %v1252
      %v1263 = vmul.f32 %v1261, %v1255
      %v1264 = vmul.f32 %v1262, %v1252
      %v1265 = vmul.f32 %v1263, %v1255
      %v1266 = vadd.f32 %v1252, %v1264
      %v1267 = vadd.f32 %v1255, %v1265
      %v1268 = vmul.f32 %v1266, 0.7978846
      %v1269 = vmul.f32 %v1267, 0.7978846
      %v1270 = vtanh.pop %v1268
      %v1271 = vtanh.pop %v1269
      %v1272 = vadd.f32 %v1270, 1.0
      %v1273 = vadd.f32 %v1271, 1.0
      %v1274 = vmul.f32 %v1258, %v1272
      %v1275 = vmul.f32 %v1259, %v1273
      %v1276 = vpack.c.bf16 %v1275, %v1274
      %v1277 = vld [vmem:[%s11] sm:$0xf]
      %v1278 = vld [vmem:[%s11 + $0x4] sm:$0xf]
      %v1279 = vld [vmem:[%s11 + $0x8] sm:$0xf]
      %v1280 = vld [vmem:[%s11 + $0xc] sm:$0xf]
      %v1281 = vld [vmem:[%s11 + $0x10] sm:$0xf]
      %v1282 = vld [vmem:[%s11 + $0x14] sm:$0xf]
      %v1283 = vld [vmem:[%s11 + $0x18] sm:$0xf]
      %v1284 = vld [vmem:[%s11 + $0x1c] sm:$0xf]
      %v1285 = vld [vmem:[%s11 + $0x20] sm:$0xf]
      %v1286 = vld [vmem:[%s11 + $0x24] sm:$0xf]
      %v1287 = vld [vmem:[%s11 + $0x28] sm:$0xf]
      %v1288 = vld [vmem:[%s11 + $0x2c] sm:$0xf]
      %v1289 = vld [vmem:[%s11 + $0x30] sm:$0xf]
      %v1290 = vld [vmem:[%s11 + $0x34] sm:$0xf]
      %v1291 = vld [vmem:[%s11 + $0x38] sm:$0xf]
      %v1292 = vld [vmem:[%s11 + $0x3c] sm:$0xf]
      %v1293 = vld [vmem:[%s12] sm:$0x1]
      %v1295 = vlaneseq
      %v1296 = vshrl.u32 %v1295, 7
      %v1297 = vsub.s32 0, %v1296
      %v1298 = vrot.slane %v1293, %v1297
      %v1316 = vunpack.c.l.b16 %v1277
      %v1317 = vunpack.c.l.b16 %v1278
      %v1318 = vunpack.c.l.b16 %v1279
      %v1319 = vunpack.c.l.b16 %v1280
      %v1320 = vunpack.c.l.b16 %v1281
      %v1321 = vunpack.c.l.b16 %v1282
      %v1322 = vunpack.c.l.b16 %v1283
      %v1323 = vunpack.c.l.b16 %v1284
      %v1324 = vunpack.c.l.b16 %v1285
      %v1325 = vunpack.c.l.b16 %v1286
      %v1326 = vunpack.c.l.b16 %v1287
      %v1327 = vunpack.c.l.b16 %v1288
      %v1328 = vunpack.c.l.b16 %v1289
      %v1329 = vunpack.c.l.b16 %v1290
      %v1330 = vunpack.c.l.b16 %v1291
      %v1331 = vunpack.c.l.b16 %v1292
      %v1332 = vpack.c.b16 %v1317, %v1316
      %v1333 = vpack.c.b16 %v1319, %v1318
      %v1334 = vpack.c.b16 %v1321, %v1320
      %v1335 = vpack.c.b16 %v1323, %v1322
      %v1336 = vpack.c.b16 %v1325, %v1324
      %v1337 = vpack.c.b16 %v1327, %v1326
      %v1338 = vpack.c.b16 %v1329, %v1328
      %v1339 = vpack.c.b16 %v1331, %v1330
      %1348 = vmatprep.subr.bf16.mxu0 0
      %1349 = vmatpush1.bf16.msra.mxu0 %v1332
      %1350 = vmatprep.subr.bf16.mxu0 0
      %1351 = vmatpush1.bf16.msra.mxu0 %v1333
      %1352 = vmatprep.subr.bf16.mxu0 0
      %1353 = vmatpush1.bf16.msra.mxu0 %v1334
      %1354 = vmatprep.subr.bf16.mxu0 0
      %1355 = vmatpush1.bf16.msra.mxu0 %v1335
      %1356 = vmatprep.subr.bf16.mxu0 0
      %1357 = vmatpush1.bf16.msra.mxu0 %v1336
      %1358 = vmatprep.subr.bf16.mxu0 0
      %1359 = vmatpush1.bf16.msra.mxu0 %v1337
      %1360 = vmatprep.subr.bf16.mxu0 0
      %1361 = vmatpush1.bf16.msra.mxu0 %v1338
      %1362 = vmatprep.subr.bf16.mxu0 0
      %1363 = vmatpush1.bf16.msra.mxu0 %v1339
      %1364 = vmatprep.subr.bf16.mxu0 0
      %1365 = vmatpush1.bf16.msra.mxu0 0
      %1366 = vmatprep.subr.bf16.mxu0 0
      %1367 = vmatpush1.bf16.msra.mxu0 0
      %1368 = vmatprep.subr.bf16.mxu0 0
      %1369 = vmatpush1.bf16.msra.mxu0 0
      %1370 = vmatprep.subr.bf16.mxu0 0
      %1371 = vmatpush1.bf16.msra.mxu0 0
      %1372 = vmatprep.subr.bf16.mxu0 0
      %1373 = vmatpush1.bf16.msra.mxu0 0
      %1374 = vmatprep.subr.bf16.mxu0 0
      %1375 = vmatpush1.bf16.msra.mxu0 0
      %1376 = vmatprep.subr.bf16.mxu0 0
      %1377 = vmatpush1.bf16.msra.mxu0 0
      %1378 = vmatprep.subr.bf16.mxu0 0
      %1379 = vmatpush1.bf16.msra.mxu0 0
      %1380 = vmatprep.mubr.bf16.mxu0 0
      %1381 = vmatmul.mubr.bf16.gmra.mrb[0].mxu0 %v1276
      %v1382 = vpop.f32.mrb[0].mxu0
      %v1383 = vadd.f32 %v1298, %v1382
      %v1384 = vpop.f32.mrb[0].mxu0
      %v1385 = vpop.f32.mrb[0].mxu0
      %v1386 = vadd.f32 %v1298, %v1385
      %v1387 = vpop.f32.mrb[0].mxu0
      %1388 = vdwg.mxu0
      %v1389 = vadd.f32 %v1144, %v1383
      %v1390 = vadd.f32 %v1145, %v1386
      %1391 = vst.msk [vmem:[%s440] sm:$0xff] %vm446, %v1389
      %1392 = vst.msk [vmem:[%s440 + $0x8] sm:$0xff] %vm446, %v1390
      %p1393 = scmp.lt.s32.totalorder %s24, 1
      %s1394 = scalar_select %p1393, %s24, 1
      %s1395 = smul.addr %s1394, 2
      %s1396 = smul.addr %s1395, 8
      %s1397 = scalar_lea.vmem %s13, %s1396
      // Predicated region
      $region73: #{deit_forward.5} parent=71 // pred_check
        %p1398 = pneg %p320
      $region74: #{deit_forward.5} parent=71 // pred_check_branch
        %1400 = sbr.rel (%p1398) target = $region76
      $region75: #{deit_forward.5} parent=71 // pred_region
        _
      $region76: #{deit_forward.5} parent=71 // pred_fallthru
        _
    $region72: #{deit_forward.5} parent=5 // pred_fallthru
      _
    %p1401 = scmp.le.s32.totalorder 2, %s19
    // Predicated region
    $region77: #{deit_forward.5} parent=5 // pred_check
      %p1402 = pneg %p1401
    $region78: #{deit_forward.5} parent=5 // pred_check_branch
      %1404 = sbr.rel (%p1402) target = $region80
    $region79: #{deit_forward.5} parent=5 // pred_region
      %s1405 = ssub.s32 %s19, 2
      // Predicated region
      $region81: #{deit_forward.5} parent=79 // pred_check
        %p1406 = pneg %p326
      $region82: #{deit_forward.5} parent=79 // pred_check_branch
        %1408 = sbr.rel (%p1406) target = $region84
      $region83: #{deit_forward.5} parent=79 // pred_region
        %p1409 = scmp.lt.s32.totalorder %s25, 1
        %s1410 = scalar_select %p1409, %s25, 1
        %s1411 = smul.addr %s1410, 2
        %s1412 = smul.addr %s1411, 8
        %s1413 = scalar_lea.vmem %s13, %s1412
      $region84: #{deit_forward.5} parent=79 // pred_fallthru
        _
    $region80: #{deit_forward.5} parent=5 // pred_fallthru
      _
  $region6: #{deit_forward.5} parent=0 // loop_footer
    %s23 = sadd.s32 1, %s19
  $region7: #{deit_forward.5} parent=0 // loop_footer_branch
    %18 = sbr.rel target = $region3
  $region8: #{deit_forward.5} parent=0 // loop_exit
    _

</llo_original>
